<compile_context>
chip_gen: v7x
topology: tpu7x:2x2x1
jax: 0.10.0
libtpu: 0.0.40
codegen_flags: <defaults>
</compile_context>

<pallas_src>
import functools

import jax
import jax.numpy as jnp
import numpy as np
from jax import lax
from jax.experimental import pallas as pl
from jax.experimental.pallas import tpu as pltpu


# ------------------------------- helpers ---------------------------------------------
def _pick_tile(n, candidates=(256, 128, 64, 32, 16, 8)):
    """Largest multiple-of-8 tile that divides n (else the full extent)."""
    for t in candidates:
        if n >= t and n % t == 0:
            return t
    return n


def _vmem_limit_bytes(fraction=0.75):
    """Generation-aware scoped-VMEM limit (review: never hard-code 64 MiB)."""
    try:
        info = pltpu.get_tpu_info()
        cap = getattr(info, "vmem_capacity_bytes", None)
        if cap is None:
            return None
        return int(cap * fraction)
    except Exception:
        return None


# ------------------------------- kernel 1: edge phase --------------------------------
def edge_phase_kernel(efeat_ref, src_ref, dst_ref, feat_ref,
                      wa_src_ref, wa_dst_ref, ba_ref,
                      we1_ref, be1_ref, we2_ref, be2_ref,
                      attn_ref, msg1_ref, msg2_ref,
                      *, n_nodes, fin, fout, slope):
    # efeat_ref:[tE,Fe]  src/dst_ref:[tE,1] i32  feat_ref:[N,Fin]
    # wa_*:[Fin,1] ba:[1,1]  we_t:[Fe,Fin*Fout] be_t:[1,Fin*Fout]
    # outputs: attn:[tE,1] f32, msg_t:[tE,Fout] f32
    feat = feat_ref[...]
    t_e = src_ref.shape[0]
    node_iota = lax.broadcasted_iota(jnp.int32, (t_e, n_nodes), 1)        # [tE, N]
    src_oh = (src_ref[...] == node_iota).astype(jnp.float32)
    dst_oh = (dst_ref[...] == node_iota).astype(jnp.float32)
    # Gather z_src / z_dst as one-hot MXU matmuls (exact for f32 features).
    z_src = jnp.dot(src_oh, feat, preferred_element_type=jnp.float32)     # [tE, Fin]
    z_dst = jnp.dot(dst_oh, feat, preferred_element_type=jnp.float32)

    # attn_fc(cat([z_src, z_dst])) == z_src @ Wa_src + z_dst @ Wa_dst + b
    a = (jnp.dot(z_src, wa_src_ref[...], preferred_element_type=jnp.float32)
         + jnp.dot(z_dst, wa_dst_ref[...], preferred_element_type=jnp.float32)
         + ba_ref[...])
    attn_ref[...] = jnp.where(a > 0, a, slope * a)                        # leaky_relu

    ef = efeat_ref[...]

    def emit_messages(we_ref, be_ref, msg_ref):
        # Per-edge weight matrix: edge_func(efeat[e]).reshape(Fin, Fout) (row-major).
        w = jnp.dot(ef, we_ref[...], preferred_element_type=jnp.float32) + be_ref[...]
        # Message m[e, o] = sum_i h_src[e, i] * w[e, i, o]  (pre-reduced over Fin —
        # this commutes with the alpha-weighted edge sum done in the node phase).
        acc = jnp.zeros((t_e, fout), jnp.float32)
        for i in range(fin):                      # static unroll, VPU multiply-adds
            acc = acc + z_src[:, i:i + 1] * w[:, i * fout:(i + 1) * fout]
        msg_ref[...] = acc                        # stored immediately (short live range)

    emit_messages(we1_ref, be1_ref, msg1_ref)
    emit_messages(we2_ref, be2_ref, msg2_ref)


# ------------------------------- kernel 2: node phase --------------------------------
def node_phase_kernel(attn_ref, dst_ref, etype_ref, msg1_ref, msg2_ref, bias_ref,
                      out_ref):
    # attn_ref:[1,E] f32   dst/etype_ref:[1,E] i32   msg_t:[E,Fout]   bias:[1,Fout]
    # out_ref:[tN,Fout]
    t_n = out_ref.shape[0]
    n_e = attn_ref.shape[1]
    v_ids = pl.program_id(0) * t_n + lax.broadcasted_iota(jnp.int32, (t_n, n_e), 0)
    dst = dst_ref[...]
    et = etype_ref[...]
    attn = attn_ref[...]
    on_dst = dst == v_ids                                                 # [tN, E]

    def aggregate(type_id, msg_ref):
        member = jnp.logical_and(on_dst, et == type_id)                   # [tN, E]
        s = jnp.where(member, attn, jnp.float32(-1e30))
        m = jnp.max(s, axis=-1, keepdims=True)
        e = jnp.where(member, jnp.exp(s - m), 0.0)
        den = jnp.sum(e, axis=-1, keepdims=True)
        # Exact reciprocal (review flagged approx-recip error). Zero-degree rows get
        # alpha == 0, matching DGL's zero fill for nodes that receive no messages.
        alpha = e / jnp.maximum(den, jnp.float32(1e-30))
        return jnp.dot(alpha, msg_ref[...], preferred_element_type=jnp.float32)

    out_ref[...] = aggregate(0, msg1_ref) + aggregate(1, msg2_ref) + bias_ref[...]


# ------------------------------- one-time parameter prep -----------------------------
def prepare_gnn_params(params, in_feats):
    """Init-time weight prep (NOT per forward): transpose nn.Linear [out,in] weights to
    [in,out] and split attn_fc into its z_src / z_dst halves so the kernels never
    concatenate or transpose at runtime."""
    wa = params["attn_w"]                                   # [1, 2*Fin]
    return {
        "wa_src": jnp.asarray(wa[:, :in_feats].T),          # [Fin, 1]
        "wa_dst": jnp.asarray(wa[:, in_feats:].T),          # [Fin, 1]
        "ba": jnp.asarray(params["attn_b"]).reshape(1, 1),
        "we1": jnp.asarray(params["edge1_w"].T),            # [Fe, Fin*Fout]
        "be1": jnp.asarray(params["edge1_b"]).reshape(1, -1),
        "we2": jnp.asarray(params["edge2_w"].T),
        "be2": jnp.asarray(params["edge2_b"]).reshape(1, -1),
        "bias": jnp.asarray(params["bias"]).reshape(1, -1),  # [1, Fout]
    }


# ------------------------------- forward wrapper --------------------------------------
def gnn_forward(feat, efeat, src_idx, dst_idx, etype, prepared, out_feats):
    """Pallas forward of gnn.forward (residual=False, bias=True)."""
    n_nodes, fin = feat.shape
    n_edges, fe = efeat.shape
    fout = out_feats
    vmem_limit = _vmem_limit_bytes()

    # ---- edge phase -------------------------------------------------------
    t_e = _pick_tile(n_edges)
    src_col = src_idx.reshape(n_edges, 1).astype(jnp.int32)
    dst_col = dst_idx.reshape(n_edges, 1).astype(jnp.int32)

    edge_cost = pl.CostEstimate(
        flops=2 * n_edges * (2 * n_nodes * fin + 2 * fin
                             + 2 * fe * fin * fout + 2 * fin * fout),
        transcendentals=0,
        bytes_accessed=4 * (efeat.size + 2 * n_edges + feat.size + 2 * fin + 1
                            + 2 * (fe + 1) * fin * fout + n_edges * (1 + 2 * fout)),
    )
    attn, msg1, msg2 = pl.pallas_call(
        functools.partial(edge_phase_kernel, n_nodes=n_nodes, fin=fin, fout=fout,
                          slope=0.01),
        grid=(n_edges // t_e,),
        in_specs=[
            pl.BlockSpec((t_e, fe), lambda e: (e, 0)),
            pl.BlockSpec((t_e, 1), lambda e: (e, 0)),
            pl.BlockSpec((t_e, 1), lambda e: (e, 0)),
            pl.BlockSpec((n_nodes, fin), lambda e: (0, 0)),      # VMEM-resident
            pl.BlockSpec((fin, 1), lambda e: (0, 0)),
            pl.BlockSpec((fin, 1), lambda e: (0, 0)),
            pl.BlockSpec((1, 1), lambda e: (0, 0)),
            pl.BlockSpec((fe, fin * fout), lambda e: (0, 0)),
            pl.BlockSpec((1, fin * fout), lambda e: (0, 0)),
            pl.BlockSpec((fe, fin * fout), lambda e: (0, 0)),
            pl.BlockSpec((1, fin * fout), lambda e: (0, 0)),
        ],
        out_specs=[
            pl.BlockSpec((t_e, 1), lambda e: (e, 0)),
            pl.BlockSpec((t_e, fout), lambda e: (e, 0)),
            pl.BlockSpec((t_e, fout), lambda e: (e, 0)),
        ],
        out_shape=[
            jax.ShapeDtypeStruct((n_edges, 1), jnp.float32),
            jax.ShapeDtypeStruct((n_edges, fout), jnp.float32),
            jax.ShapeDtypeStruct((n_edges, fout), jnp.float32),
        ],
        compiler_params=pltpu.CompilerParams(
            dimension_semantics=("parallel",), vmem_limit_bytes=vmem_limit),
        cost_estimate=edge_cost,
    )(efeat, src_col, dst_col, feat,
      prepared["wa_src"], prepared["wa_dst"], prepared["ba"],
      prepared["we1"], prepared["be1"], prepared["we2"], prepared["be2"])

    # ---- node phase -------------------------------------------------------
    t_n = _pick_tile(n_nodes)
    attn_row = attn.reshape(1, n_edges)
    dst_row = dst_idx.reshape(1, n_edges).astype(jnp.int32)
    etype_row = etype.reshape(1, n_edges).astype(jnp.int32)

    node_cost = pl.CostEstimate(
        flops=2 * 2 * n_nodes * n_edges * fout + 8 * n_nodes * n_edges,
        transcendentals=2 * n_nodes * n_edges,
        bytes_accessed=4 * (3 * n_edges + 2 * n_edges * fout + fout + n_nodes * fout),
    )
    out = pl.pallas_call(
        node_phase_kernel,
        grid=(n_nodes // t_n,),
        in_specs=[
            pl.BlockSpec((1, n_edges), lambda n: (0, 0)),
            pl.BlockSpec((1, n_edges), lambda n: (0, 0)),
            pl.BlockSpec((1, n_edges), lambda n: (0, 0)),
            pl.BlockSpec((n_edges, fout), lambda n: (0, 0)),
            pl.BlockSpec((n_edges, fout), lambda n: (0, 0)),
            pl.BlockSpec((1, fout), lambda n: (0, 0)),
        ],
        out_specs=pl.BlockSpec((t_n, fout), lambda n: (n, 0)),
        out_shape=jax.ShapeDtypeStruct((n_nodes, fout), jnp.float32),
        compiler_params=pltpu.CompilerParams(
            dimension_semantics=("parallel",), vmem_limit_bytes=vmem_limit),
        cost_estimate=node_cost,
    )(attn_row, dst_row, etype_row, msg1, msg2, prepared["bias"])
    return out


# ------------------------------- pure-JAX reference -----------------------------------
def gnn_reference(feat, efeat, src, dst, etype, params):
    """Follows the torch/DGL op order of gnn.forward exactly (eager, per-node loop)."""
    n_nodes, fin = feat.shape
    n_edges = efeat.shape[0]
    fout = params["bias"].shape[0]
    w1 = (efeat @ params["edge1_w"].T + params["edge1_b"]).reshape(n_edges, fin, fout)
    w2 = (efeat @ params["edge2_w"].T + params["edge2_b"]).reshape(n_edges, fin, fout)
    z2 = jnp.concatenate([feat[src], feat[dst]], axis=1)
    a = z2 @ params["attn_w"].T + params["attn_b"]
    attn = jnp.where(a > 0, a, 0.01 * a)[:, 0]              # leaky_relu, [E]
    h_src = feat[src][:, :, None]                           # [E, Fin, 1]
    m1 = h_src * w1
    m2 = h_src * w2
    dst_np = np.asarray(dst)
    et_np = np.asarray(etype)
    rst = jnp.zeros((n_nodes, fout), jnp.float32)
    for type_id, m_t in ((0, m1), (1, m2)):
        for v in range(n_nodes):
            eids = np.nonzero((dst_np == v) & (et_np == type_id))[0]
            if eids.size == 0:
                continue                                    # DGL zero-fill
            alpha = jax.nn.softmax(attn[eids])
            neigh = jnp.sum(alpha[:, None, None] * m_t[eids], axis=0)   # [Fin, Fout]
            rst = rst.at[v].add(neigh.sum(axis=0))
    return rst + params["bias"][None, :]


if __name__ == "__main__":
    N_NODES, N_EDGES = 24, 48
    F_IN, F_OUT, F_E = 8, 8, 4

    key = jax.random.PRNGKey(0)
    keys = jax.random.split(key, 11)
    feat = jax.random.normal(keys[0], (N_NODES, F_IN), jnp.float32)
    efeat = jax.random.normal(keys[1], (N_EDGES, F_E), jnp.float32)
    src_idx = jax.random.randint(keys[2], (N_EDGES,), 0, N_NODES, dtype=jnp.int32)
    dst_idx = jax.random.randint(keys[3], (N_EDGES,), 0, N_NODES, dtype=jnp.int32)
    etype = (jnp.arange(N_EDGES) % 2).astype(jnp.int32)     # both edge types present

    s = 0.5
    params = {
        "attn_w": jax.random.uniform(keys[4], (1, 2 * F_IN), jnp.float32, -s, s),
        "attn_b": jax.random.uniform(keys[5], (1,), jnp.float32, -s, s),
        "edge1_w": jax.random.uniform(keys[6], (F_IN * F_OUT, F_E), jnp.float32, -s, s),
        "edge1_b": jax.random.uniform(keys[7], (F_IN * F_OUT,), jnp.float32, -s, s),
        "edge2_w": jax.random.uniform(keys[8], (F_IN * F_OUT, F_E), jnp.float32, -s, s),
        "edge2_b": jax.random.uniform(keys[9], (F_IN * F_OUT,), jnp.float32, -s, s),
        "bias": jax.random.uniform(keys[10], (F_OUT,), jnp.float32, -s, s),
    }

    # One-time weight prep (lives at parameter-init time in a real model).
    prepared = prepare_gnn_params(params, F_IN)

    out = gnn_forward(feat, efeat, src_idx, dst_idx, etype, prepared, F_OUT)
    out = jax.block_until_ready(out)

    ref = gnn_reference(feat, efeat, src_idx, dst_idx, etype, params)
    assert out.shape == (N_NODES, F_OUT)
    err = float(jnp.max(jnp.abs(out - ref)))
    assert jnp.allclose(out, ref, atol=1e-4, rtol=1e-4), (
        "mismatch vs reference: max abs err = %f" % err)

    print("KERNEL_OK")
</pallas_src>

<mosaic_0001>
module attributes {stable_mosaic.version = 11 : i64} {
  func.func @edge_phase_kernel(%arg0: i32, %arg1: memref<16x4xf32, #tpu.memory_space<vmem>>, %arg2: memref<16x1xi32, #tpu.memory_space<vmem>>, %arg3: memref<16x1xi32, #tpu.memory_space<vmem>>, %arg4: memref<24x8xf32, #tpu.memory_space<vmem>>, %arg5: memref<8x1xf32, #tpu.memory_space<vmem>>, %arg6: memref<8x1xf32, #tpu.memory_space<vmem>>, %arg7: memref<1x1xf32, #tpu.memory_space<vmem>>, %arg8: memref<4x64xf32, #tpu.memory_space<vmem>>, %arg9: memref<1x64xf32, #tpu.memory_space<vmem>>, %arg10: memref<4x64xf32, #tpu.memory_space<vmem>>, %arg11: memref<1x64xf32, #tpu.memory_space<vmem>>, %arg12: memref<16x1xf32, #tpu.memory_space<vmem>>, %arg13: memref<16x8xf32, #tpu.memory_space<vmem>>, %arg14: memref<16x8xf32, #tpu.memory_space<vmem>>) attributes {dimension_semantics = [#tpu.dimension_semantics<parallel>], iteration_bounds = array<i64: 3>, scalar_prefetch = 0 : i64, scratch_operands = 0 : i64, tpu.core_type = #tpu.core_type<tc>, window_params = [{transform_indices = @transform_0, window_bounds = array<i64: 16, 4>}, {transform_indices = @transform_1, window_bounds = array<i64: 16, 1>}, {transform_indices = @transform_2, window_bounds = array<i64: 16, 1>}, {pipeline_mode = #tpu.pipeline_mode<synchronous>, transform_indices = @transform_3, window_bounds = array<i64: 24, 8>}, {pipeline_mode = #tpu.pipeline_mode<synchronous>, transform_indices = @transform_4, window_bounds = array<i64: 8, 1>}, {pipeline_mode = #tpu.pipeline_mode<synchronous>, transform_indices = @transform_5, window_bounds = array<i64: 8, 1>}, {pipeline_mode = #tpu.pipeline_mode<synchronous>, transform_indices = @transform_6, window_bounds = array<i64: 1, 1>}, {pipeline_mode = #tpu.pipeline_mode<synchronous>, transform_indices = @transform_7, window_bounds = array<i64: 4, 64>}, {pipeline_mode = #tpu.pipeline_mode<synchronous>, transform_indices = @transform_8, window_bounds = array<i64: 1, 64>}, {pipeline_mode = #tpu.pipeline_mode<synchronous>, transform_indices = @transform_9, window_bounds = array<i64: 4, 64>}, {pipeline_mode = #tpu.pipeline_mode<synchronous>, transform_indices = @transform_10, window_bounds = array<i64: 1, 64>}, {transform_indices = @transform_11, window_bounds = array<i64: 16, 1>}, {transform_indices = @transform_12, window_bounds = array<i64: 16, 8>}, {transform_indices = @transform_13, window_bounds = array<i64: 16, 8>}]} {
    %c0 = arith.constant 0 : index
    %c0_0 = arith.constant 0 : index
    %0 = vector.load %arg4[%c0, %c0_0] : memref<24x8xf32, #tpu.memory_space<vmem>>, vector<24x8xf32>
    %1 = tpu.iota {dimensions = array<i32: 1>} : vector<16x24xi32>
    %c0_1 = arith.constant 0 : index
    %c0_2 = arith.constant 0 : index
    %2 = vector.load %arg2[%c0_1, %c0_2] : memref<16x1xi32, #tpu.memory_space<vmem>>, vector<16x1xi32>
    %3 = vector.broadcast %2 : vector<16x1xi32> to vector<16x24xi32>
    %4 = arith.cmpi eq, %3, %1 : vector<16x24xi32>
    %5 = arith.extui %4 : vector<16x24xi1> to vector<16x24xi32>
    %6 = arith.sitofp %5 : vector<16x24xi32> to vector<16x24xf32>
    %c0_3 = arith.constant 0 : index
    %c0_4 = arith.constant 0 : index
    %7 = vector.load %arg3[%c0_3, %c0_4] : memref<16x1xi32, #tpu.memory_space<vmem>>, vector<16x1xi32>
    %8 = vector.broadcast %7 : vector<16x1xi32> to vector<16x24xi32>
    %9 = arith.cmpi eq, %8, %1 : vector<16x24xi32>
    %10 = arith.extui %9 : vector<16x24xi1> to vector<16x24xi32>
    %11 = arith.sitofp %10 : vector<16x24xi32> to vector<16x24xf32>
    %cst = arith.constant dense<0.000000e+00> : vector<16x8xf32>
    %12 = tpu.matmul %6, %0, %cst {dimension_numbers = #tpu.dot_dimension_numbers<[1], [0], [0], [1], [0, 0, 1, 1], [], []>} : vector<16x24xf32>, vector<24x8xf32>, vector<16x8xf32> -> vector<16x8xf32>
    %cst_5 = arith.constant dense<0.000000e+00> : vector<16x8xf32>
    %13 = tpu.matmul %11, %0, %cst_5 {dimension_numbers = #tpu.dot_dimension_numbers<[1], [0], [0], [1], [0, 0, 1, 1], [], []>} : vector<16x24xf32>, vector<24x8xf32>, vector<16x8xf32> -> vector<16x8xf32>
    %c0_6 = arith.constant 0 : index
    %c0_7 = arith.constant 0 : index
    %14 = vector.load %arg5[%c0_6, %c0_7] : memref<8x1xf32, #tpu.memory_space<vmem>>, vector<8x1xf32>
    %cst_8 = arith.constant dense<0.000000e+00> : vector<16x1xf32>
    %15 = tpu.matmul %12, %14, %cst_8 {dimension_numbers = #tpu.dot_dimension_numbers<[1], [0], [0], [1], [0, 0, 1, 1], [], []>} : vector<16x8xf32>, vector<8x1xf32>, vector<16x1xf32> -> vector<16x1xf32>
    %c0_9 = arith.constant 0 : index
    %c0_10 = arith.constant 0 : index
    %16 = vector.load %arg6[%c0_9, %c0_10] : memref<8x1xf32, #tpu.memory_space<vmem>>, vector<8x1xf32>
    %cst_11 = arith.constant dense<0.000000e+00> : vector<16x1xf32>
    %17 = tpu.matmul %13, %16, %cst_11 {dimension_numbers = #tpu.dot_dimension_numbers<[1], [0], [0], [1], [0, 0, 1, 1], [], []>} : vector<16x8xf32>, vector<8x1xf32>, vector<16x1xf32> -> vector<16x1xf32>
    %18 = arith.addf %15, %17 : vector<16x1xf32>
    %c0_12 = arith.constant 0 : index
    %c0_13 = arith.constant 0 : index
    %19 = vector.load %arg7[%c0_12, %c0_13] : memref<1x1xf32, #tpu.memory_space<vmem>>, vector<1x1xf32>
    %20 = vector.broadcast %19 : vector<1x1xf32> to vector<16x1xf32>
    %21 = arith.addf %18, %20 : vector<16x1xf32>
    %cst_14 = arith.constant 0.000000e+00 : f32
    %22 = vector.broadcast %cst_14 : f32 to vector<16x1xf32>
    %23 = arith.cmpf ogt, %21, %22 : vector<16x1xf32>
    %cst_15 = arith.constant 0.00999999977 : f32
    %24 = vector.broadcast %cst_15 : f32 to vector<16x1xf32>
    %25 = arith.mulf %24, %21 : vector<16x1xf32>
    %26 = arith.select %23, %21, %25 : vector<16x1xi1>, vector<16x1xf32>
    %c0_16 = arith.constant 0 : index
    %c0_17 = arith.constant 0 : index
    %27 = vector.load %arg12[%c0_16, %c0_17] : memref<16x1xf32, #tpu.memory_space<vmem>>, vector<16x1xf32>
    tpu.vector_store %arg12[%c0_16, %c0_17], %26 {strides = array<i32>} : memref<16x1xf32, #tpu.memory_space<vmem>>, vector<16x1xf32>,
    %c0_18 = arith.constant 0 : index
    %c0_19 = arith.constant 0 : index
    %28 = vector.load %arg1[%c0_18, %c0_19] : memref<16x4xf32, #tpu.memory_space<vmem>>, vector<16x4xf32>
    %c0_20 = arith.constant 0 : index
    %c0_21 = arith.constant 0 : index
    %29 = vector.load %arg8[%c0_20, %c0_21] : memref<4x64xf32, #tpu.memory_space<vmem>>, vector<4x64xf32>
    %cst_22 = arith.constant dense<0.000000e+00> : vector<16x64xf32>
    %30 = tpu.matmul %28, %29, %cst_22 {dimension_numbers = #tpu.dot_dimension_numbers<[1], [0], [0], [1], [0, 0, 1, 1], [], []>} : vector<16x4xf32>, vector<4x64xf32>, vector<16x64xf32> -> vector<16x64xf32>
    %c0_23 = arith.constant 0 : index
    %c0_24 = arith.constant 0 : index
    %31 = vector.load %arg9[%c0_23, %c0_24] : memref<1x64xf32, #tpu.memory_space<vmem>>, vector<1x64xf32>
    %32 = vector.broadcast %31 : vector<1x64xf32> to vector<16x64xf32>
    %33 = arith.addf %30, %32 : vector<16x64xf32>
    %cst_25 = arith.constant 0.000000e+00 : f32
    %34 = vector.broadcast %cst_25 : f32 to vector<16x8xf32>
    %35 = vector.extract_strided_slice %12 {offsets = [0, 0], sizes = [16, 1], strides = [1, 1]} : vector<16x8xf32> to vector<16x1xf32>
    %36 = vector.extract_strided_slice %33 {offsets = [0, 0], sizes = [16, 8], strides = [1, 1]} : vector<16x64xf32> to vector<16x8xf32>
    %37 = vector.broadcast %35 : vector<16x1xf32> to vector<16x8xf32>
    %38 = arith.mulf %37, %36 : vector<16x8xf32>
    %39 = arith.addf %34, %38 : vector<16x8xf32>
    %40 = vector.extract_strided_slice %12 {offsets = [0, 1], sizes = [16, 1], strides = [1, 1]} : vector<16x8xf32> to vector<16x1xf32>
    %41 = vector.extract_strided_slice %33 {offsets = [0, 8], sizes = [16, 8], strides = [1, 1]} : vector<16x64xf32> to vector<16x8xf32>
    %42 = vector.broadcast %40 : vector<16x1xf32> to vector<16x8xf32>
    %43 = arith.mulf %42, %41 : vector<16x8xf32>
    %44 = arith.addf %39, %43 : vector<16x8xf32>
    %45 = vector.extract_strided_slice %12 {offsets = [0, 2], sizes = [16, 1], strides = [1, 1]} : vector<16x8xf32> to vector<16x1xf32>
    %46 = vector.extract_strided_slice %33 {offsets = [0, 16], sizes = [16, 8], strides = [1, 1]} : vector<16x64xf32> to vector<16x8xf32>
    %47 = vector.broadcast %45 : vector<16x1xf32> to vector<16x8xf32>
    %48 = arith.mulf %47, %46 : vector<16x8xf32>
    %49 = arith.addf %44, %48 : vector<16x8xf32>
    %50 = vector.extract_strided_slice %12 {offsets = [0, 3], sizes = [16, 1], strides = [1, 1]} : vector<16x8xf32> to vector<16x1xf32>
    %51 = vector.extract_strided_slice %33 {offsets = [0, 24], sizes = [16, 8], strides = [1, 1]} : vector<16x64xf32> to vector<16x8xf32>
    %52 = vector.broadcast %50 : vector<16x1xf32> to vector<16x8xf32>
    %53 = arith.mulf %52, %51 : vector<16x8xf32>
    %54 = arith.addf %49, %53 : vector<16x8xf32>
    %55 = vector.extract_strided_slice %12 {offsets = [0, 4], sizes = [16, 1], strides = [1, 1]} : vector<16x8xf32> to vector<16x1xf32>
    %56 = vector.extract_strided_slice %33 {offsets = [0, 32], sizes = [16, 8], strides = [1, 1]} : vector<16x64xf32> to vector<16x8xf32>
    %57 = vector.broadcast %55 : vector<16x1xf32> to vector<16x8xf32>
    %58 = arith.mulf %57, %56 : vector<16x8xf32>
    %59 = arith.addf %54, %58 : vector<16x8xf32>
    %60 = vector.extract_strided_slice %12 {offsets = [0, 5], sizes = [16, 1], strides = [1, 1]} : vector<16x8xf32> to vector<16x1xf32>
    %61 = vector.extract_strided_slice %33 {offsets = [0, 40], sizes = [16, 8], strides = [1, 1]} : vector<16x64xf32> to vector<16x8xf32>
    %62 = vector.broadcast %60 : vector<16x1xf32> to vector<16x8xf32>
    %63 = arith.mulf %62, %61 : vector<16x8xf32>
    %64 = arith.addf %59, %63 : vector<16x8xf32>
    %65 = vector.extract_strided_slice %12 {offsets = [0, 6], sizes = [16, 1], strides = [1, 1]} : vector<16x8xf32> to vector<16x1xf32>
    %66 = vector.extract_strided_slice %33 {offsets = [0, 48], sizes = [16, 8], strides = [1, 1]} : vector<16x64xf32> to vector<16x8xf32>
    %67 = vector.broadcast %65 : vector<16x1xf32> to vector<16x8xf32>
    %68 = arith.mulf %67, %66 : vector<16x8xf32>
    %69 = arith.addf %64, %68 : vector<16x8xf32>
    %70 = vector.extract_strided_slice %12 {offsets = [0, 7], sizes = [16, 1], strides = [1, 1]} : vector<16x8xf32> to vector<16x1xf32>
    %71 = vector.extract_strided_slice %33 {offsets = [0, 56], sizes = [16, 8], strides = [1, 1]} : vector<16x64xf32> to vector<16x8xf32>
    %72 = vector.broadcast %70 : vector<16x1xf32> to vector<16x8xf32>
    %73 = arith.mulf %72, %71 : vector<16x8xf32>
    %74 = arith.addf %69, %73 : vector<16x8xf32>
    %c0_26 = arith.constant 0 : index
    %c0_27 = arith.constant 0 : index
    %75 = vector.load %arg13[%c0_26, %c0_27] : memref<16x8xf32, #tpu.memory_space<vmem>>, vector<16x8xf32>
    tpu.vector_store %arg13[%c0_26, %c0_27], %74 {strides = array<i32>} : memref<16x8xf32, #tpu.memory_space<vmem>>, vector<16x8xf32>,
    %c0_28 = arith.constant 0 : index
    %c0_29 = arith.constant 0 : index
    %76 = vector.load %arg10[%c0_28, %c0_29] : memref<4x64xf32, #tpu.memory_space<vmem>>, vector<4x64xf32>
    %cst_30 = arith.constant dense<0.000000e+00> : vector<16x64xf32>
    %77 = tpu.matmul %28, %76, %cst_30 {dimension_numbers = #tpu.dot_dimension_numbers<[1], [0], [0], [1], [0, 0, 1, 1], [], []>} : vector<16x4xf32>, vector<4x64xf32>, vector<16x64xf32> -> vector<16x64xf32>
    %c0_31 = arith.constant 0 : index
    %c0_32 = arith.constant 0 : index
    %78 = vector.load %arg11[%c0_31, %c0_32] : memref<1x64xf32, #tpu.memory_space<vmem>>, vector<1x64xf32>
    %79 = vector.broadcast %78 : vector<1x64xf32> to vector<16x64xf32>
    %80 = arith.addf %77, %79 : vector<16x64xf32>
    %cst_33 = arith.constant 0.000000e+00 : f32
    %81 = vector.broadcast %cst_33 : f32 to vector<16x8xf32>
    %82 = vector.extract_strided_slice %12 {offsets = [0, 0], sizes = [16, 1], strides = [1, 1]} : vector<16x8xf32> to vector<16x1xf32>
    %83 = vector.extract_strided_slice %80 {offsets = [0, 0], sizes = [16, 8], strides = [1, 1]} : vector<16x64xf32> to vector<16x8xf32>
    %84 = vector.broadcast %82 : vector<16x1xf32> to vector<16x8xf32>
    %85 = arith.mulf %84, %83 : vector<16x8xf32>
    %86 = arith.addf %81, %85 : vector<16x8xf32>
    %87 = vector.extract_strided_slice %12 {offsets = [0, 1], sizes = [16, 1], strides = [1, 1]} : vector<16x8xf32> to vector<16x1xf32>
    %88 = vector.extract_strided_slice %80 {offsets = [0, 8], sizes = [16, 8], strides = [1, 1]} : vector<16x64xf32> to vector<16x8xf32>
    %89 = vector.broadcast %87 : vector<16x1xf32> to vector<16x8xf32>
    %90 = arith.mulf %89, %88 : vector<16x8xf32>
    %91 = arith.addf %86, %90 : vector<16x8xf32>
    %92 = vector.extract_strided_slice %12 {offsets = [0, 2], sizes = [16, 1], strides = [1, 1]} : vector<16x8xf32> to vector<16x1xf32>
    %93 = vector.extract_strided_slice %80 {offsets = [0, 16], sizes = [16, 8], strides = [1, 1]} : vector<16x64xf32> to vector<16x8xf32>
    %94 = vector.broadcast %92 : vector<16x1xf32> to vector<16x8xf32>
    %95 = arith.mulf %94, %93 : vector<16x8xf32>
    %96 = arith.addf %91, %95 : vector<16x8xf32>
    %97 = vector.extract_strided_slice %12 {offsets = [0, 3], sizes = [16, 1], strides = [1, 1]} : vector<16x8xf32> to vector<16x1xf32>
    %98 = vector.extract_strided_slice %80 {offsets = [0, 24], sizes = [16, 8], strides = [1, 1]} : vector<16x64xf32> to vector<16x8xf32>
    %99 = vector.broadcast %97 : vector<16x1xf32> to vector<16x8xf32>
    %100 = arith.mulf %99, %98 : vector<16x8xf32>
    %101 = arith.addf %96, %100 : vector<16x8xf32>
    %102 = vector.extract_strided_slice %12 {offsets = [0, 4], sizes = [16, 1], strides = [1, 1]} : vector<16x8xf32> to vector<16x1xf32>
    %103 = vector.extract_strided_slice %80 {offsets = [0, 32], sizes = [16, 8], strides = [1, 1]} : vector<16x64xf32> to vector<16x8xf32>
    %104 = vector.broadcast %102 : vector<16x1xf32> to vector<16x8xf32>
    %105 = arith.mulf %104, %103 : vector<16x8xf32>
    %106 = arith.addf %101, %105 : vector<16x8xf32>
    %107 = vector.extract_strided_slice %12 {offsets = [0, 5], sizes = [16, 1], strides = [1, 1]} : vector<16x8xf32> to vector<16x1xf32>
    %108 = vector.extract_strided_slice %80 {offsets = [0, 40], sizes = [16, 8], strides = [1, 1]} : vector<16x64xf32> to vector<16x8xf32>
    %109 = vector.broadcast %107 : vector<16x1xf32> to vector<16x8xf32>
    %110 = arith.mulf %109, %108 : vector<16x8xf32>
    %111 = arith.addf %106, %110 : vector<16x8xf32>
    %112 = vector.extract_strided_slice %12 {offsets = [0, 6], sizes = [16, 1], strides = [1, 1]} : vector<16x8xf32> to vector<16x1xf32>
    %113 = vector.extract_strided_slice %80 {offsets = [0, 48], sizes = [16, 8], strides = [1, 1]} : vector<16x64xf32> to vector<16x8xf32>
    %114 = vector.broadcast %112 : vector<16x1xf32> to vector<16x8xf32>
    %115 = arith.mulf %114, %113 : vector<16x8xf32>
    %116 = arith.addf %111, %115 : vector<16x8xf32>
    %117 = vector.extract_strided_slice %12 {offsets = [0, 7], sizes = [16, 1], strides = [1, 1]} : vector<16x8xf32> to vector<16x1xf32>
    %118 = vector.extract_strided_slice %80 {offsets = [0, 56], sizes = [16, 8], strides = [1, 1]} : vector<16x64xf32> to vector<16x8xf32>
    %119 = vector.broadcast %117 : vector<16x1xf32> to vector<16x8xf32>
    %120 = arith.mulf %119, %118 : vector<16x8xf32>
    %121 = arith.addf %116, %120 : vector<16x8xf32>
    %c0_34 = arith.constant 0 : index
    %c0_35 = arith.constant 0 : index
    %122 = vector.load %arg14[%c0_34, %c0_35] : memref<16x8xf32, #tpu.memory_space<vmem>>, vector<16x8xf32>
    tpu.vector_store %arg14[%c0_34, %c0_35], %121 {strides = array<i32>} : memref<16x8xf32, #tpu.memory_space<vmem>>, vector<16x8xf32>,
    return
  }
  func.func @transform_0(%arg0: i32) -> (i32, i32) {
    %c0_i32 = arith.constant 0 : i32
    %c0_i32_0 = arith.constant 0 : i32
    return %arg0, %c0_i32 : i32, i32
  }
  func.func @transform_1(%arg0: i32) -> (i32, i32) {
    %c0_i32 = arith.constant 0 : i32
    %c0_i32_0 = arith.constant 0 : i32
    return %arg0, %c0_i32 : i32, i32
  }
  func.func @transform_2(%arg0: i32) -> (i32, i32) {
    %c0_i32 = arith.constant 0 : i32
    %c0_i32_0 = arith.constant 0 : i32
    return %arg0, %c0_i32 : i32, i32
  }
  func.func @transform_3(%arg0: i32) -> (i32, i32) {
    %c0_i32 = arith.constant 0 : i32
    %c0_i32_0 = arith.constant 0 : i32
    %c0_i32_1 = arith.constant 0 : i32
    return %c0_i32, %c0_i32_0 : i32, i32
  }
  func.func @transform_4(%arg0: i32) -> (i32, i32) {
    %c0_i32 = arith.constant 0 : i32
    %c0_i32_0 = arith.constant 0 : i32
    %c0_i32_1 = arith.constant 0 : i32
    return %c0_i32, %c0_i32_0 : i32, i32
  }
  func.func @transform_5(%arg0: i32) -> (i32, i32) {
    %c0_i32 = arith.constant 0 : i32
    %c0_i32_0 = arith.constant 0 : i32
    %c0_i32_1 = arith.constant 0 : i32
    return %c0_i32, %c0_i32_0 : i32, i32
  }
  func.func @transform_6(%arg0: i32) -> (i32, i32) {
    %c0_i32 = arith.constant 0 : i32
    %c0_i32_0 = arith.constant 0 : i32
    %c0_i32_1 = arith.constant 0 : i32
    return %c0_i32, %c0_i32_0 : i32, i32
  }
  func.func @transform_7(%arg0: i32) -> (i32, i32) {
    %c0_i32 = arith.constant 0 : i32
    %c0_i32_0 = arith.constant 0 : i32
    %c0_i32_1 = arith.constant 0 : i32
    return %c0_i32, %c0_i32_0 : i32, i32
  }
  func.func @transform_8(%arg0: i32) -> (i32, i32) {
    %c0_i32 = arith.constant 0 : i32
    %c0_i32_0 = arith.constant 0 : i32
    %c0_i32_1 = arith.constant 0 : i32
    return %c0_i32, %c0_i32_0 : i32, i32
  }
  func.func @transform_9(%arg0: i32) -> (i32, i32) {
    %c0_i32 = arith.constant 0 : i32
    %c0_i32_0 = arith.constant 0 : i32
    %c0_i32_1 = arith.constant 0 : i32
    return %c0_i32, %c0_i32_0 : i32, i32
  }
  func.func @transform_10(%arg0: i32) -> (i32, i32) {
    %c0_i32 = arith.constant 0 : i32
    %c0_i32_0 = arith.constant 0 : i32
    %c0_i32_1 = arith.constant 0 : i32
    return %c0_i32, %c0_i32_0 : i32, i32
  }
  func.func @transform_11(%arg0: i32) -> (i32, i32) {
    %c0_i32 = arith.constant 0 : i32
    %c0_i32_0 = arith.constant 0 : i32
    return %arg0, %c0_i32 : i32, i32
  }
  func.func @transform_12(%arg0: i32) -> (i32, i32) {
    %c0_i32 = arith.constant 0 : i32
    %c0_i32_0 = arith.constant 0 : i32
    return %arg0, %c0_i32 : i32, i32
  }
  func.func @transform_13(%arg0: i32) -> (i32, i32) {
    %c0_i32 = arith.constant 0 : i32
    %c0_i32_0 = arith.constant 0 : i32
    return %arg0, %c0_i32 : i32, i32
  }
}

</mosaic_0001>

<llo_original>
// kernel: tpu_custom_call.1
$region0: #{tpu_custom_call.1}
  #allocation0 [shape = 'u32[]', space=smem, size = 0x4, offset = 0x4, fixed_abs, tag = 'smem constant byte address 0x4 - core index']
  #allocation1 [shape = 'u32[144,128]{1,0:T(1,128)}', space=vmem, size = 0x12000, scoped, tag = 'internal scratch']
  #allocation2 [shape = 'f32[1,1]{1,0:T(1,128)S(1)}', space=vmem, size = 0x200, scoped, tag = 'scoped memory for tpu_custom_call.1']
  %s0 = inlined_call_operand.vmem [shape: f32[48,4], index: 0, kind: input, shape index: {}]
  %s1 = inlined_call_operand.vmem [shape: s32[48,1], index: 1, kind: input, shape index: {}]
  %s2 = inlined_call_operand.vmem [shape: s32[48,1], index: 2, kind: input, shape index: {}]
  %s3 = inlined_call_operand.vmem [shape: f32[24,8], index: 3, kind: input, shape index: {}]
  %s4 = inlined_call_operand.vmem [shape: f32[8,1], index: 4, kind: input, shape index: {}]
  %s5 = inlined_call_operand.vmem [shape: f32[8,1], index: 5, kind: input, shape index: {}]
  %s6 = inlined_call_operand.<no memory space> [shape: f32[1,1], index: 6, kind: input, shape index: {}]
  %s7 = inlined_call_operand.vmem [shape: f32[4,64], index: 7, kind: input, shape index: {}]
  %s8 = inlined_call_operand.vmem [shape: f32[1,64], index: 8, kind: input, shape index: {}]
  %s9 = inlined_call_operand.vmem [shape: f32[4,64], index: 9, kind: input, shape index: {}]
  %s10 = inlined_call_operand.vmem [shape: f32[1,64], index: 10, kind: input, shape index: {}]
  %s11 = inlined_call_operand.vmem [shape: f32[48,1], index: 11, kind: output, shape index: {0}]
  %s12 = inlined_call_operand.vmem [shape: f32[48,8], index: 12, kind: output, shape index: {1}]
  %s13 = inlined_call_operand.vmem [shape: f32[48,8], index: 13, kind: output, shape index: {2}]
  %14 = xla_tuple %s11, %s12, %s13
  %s15 = sld [smem:[#allocation0]]
  $region93: #{tpu_custom_call.1} parent=0
    _
  %s17 = ssub.s32 1, %s15
  %s18 = scalar_select 0, %s17, %s15
  %v19 = vstv %s6
  %20 = vst [vmem:[#allocation2] sm:$0x1] %v19
  loop: start=0, step=1, limit=5
  $region2: #{tpu_custom_call.1} parent=0 // loop_pre_header
    _
  $region3: #{tpu_custom_call.1} parent=0 // loop_header
    %s22 = sphi 0, %s26
    %p23 = scmp.ge.s32.totalorder %s22, 5
    %s32 = sphi 0, %s34
    %s35 = sphi 0, %s32
    %s36 = sphi 0, %s35
    %s52 = sphi 0, %s36
    %s58 = sphi 0, %s60
    %s61 = sphi 0, %s58
    %s62 = sphi 0, %s61
    %s78 = sphi 0, %s62
    %s84 = sphi 0, %s86
    %s87 = sphi 0, %s84
    %s88 = sphi 0, %s87
    %s104 = sphi 0, %s88
    %s108 = sphi 0, %s108
    %s110 = sphi 0, %s108
    %s111 = sphi 0, %s110
    %s125 = sphi 0, %s111
    %s129 = sphi 0, %s129
    %s131 = sphi 0, %s129
    %s132 = sphi 0, %s131
    %s146 = sphi 0, %s132
    %s150 = sphi 0, %s150
    %s152 = sphi 0, %s150
    %s153 = sphi 0, %s152
    %s167 = sphi 0, %s153
    %s171 = sphi 0, %s171
    %s173 = sphi 0, %s171
    %s174 = sphi 0, %s173
    %s188 = sphi 0, %s174
    %s192 = sphi 0, %s192
    %s194 = sphi 0, %s192
    %s195 = sphi 0, %s194
    %s209 = sphi 0, %s195
    %s213 = sphi 0, %s213
    %s215 = sphi 0, %s213
    %s216 = sphi 0, %s215
    %s230 = sphi 0, %s216
    %s234 = sphi 0, %s234
    %s236 = sphi 0, %s234
    %s237 = sphi 0, %s236
    %s251 = sphi 0, %s237
    %s255 = sphi 0, %s255
    %s257 = sphi 0, %s255
    %s258 = sphi 0, %s257
    %s272 = sphi 0, %s258
    %s278 = sphi 0, %s280
    %s281 = sphi 0, %s278
    %s282 = sphi 0, %s281
    %s298 = sphi 0, %s282
    %s304 = sphi 0, %s306
    %s307 = sphi 0, %s304
    %s308 = sphi 0, %s307
    %s324 = sphi 0, %s308
    %s330 = sphi 0, %s332
    %s333 = sphi 0, %s330
    %s334 = sphi 0, %s333
    %s350 = sphi 0, %s334
  $region4: #{tpu_custom_call.1} parent=0 // loop_header_branch
    %25 = sbr.rel (%p23) target = $region8
  $region5: #{tpu_custom_call.1} parent=0 // loop_body
    %s27 = ssub.s32 %s22, 1
    %s28 = ssub.s32 %s22, 2
    %s29 = sadd.s32 %s22, 1
    %s30 = ssub.s32 %s22, %s29
    %p31 = scmp.eq.s32.totalorder %s30, 0
    %s33 = sadd.s32 %s32, 1
    %s34 = scalar_select %p31, %s32, %s33
    %p37 = pneg %p31
    %p38 = scmp.eq.s32.totalorder %s22, 2
    %p39 = por %p37, %p38
    %p40 = scmp.ne.s32.totalorder %s32, %s35
    %p41 = scmp.eq.s32.totalorder %s22, 0
    %p42 = por %p40, %p41
    %p43 = scmp.ne.s32.totalorder %s32, %s35
    %p44 = scmp.eq.s32.totalorder %s27, 2
    %p45 = por %p43, %p44
    %p46 = scmp.ne.s32.totalorder %s35, %s36
    %p47 = scmp.eq.s32.totalorder %s27, 0
    %p48 = por %p46, %p47
    %p49 = scmp.ne.s32.totalorder %s35, %s36
    %p50 = scmp.eq.s32.totalorder %s28, 2
    %p51 = por %p49, %p50
    %p53 = scmp.ne.s32.totalorder %s36, %s52
    %p54 = scmp.eq.s32.totalorder %s28, 0
    %p55 = por %p53, %p54
    %s56 = ssub.s32 %s22, %s29
    %p57 = scmp.eq.s32.totalorder %s56, 0
    %s59 = sadd.s32 %s58, 1
    %s60 = scalar_select %p57, %s58, %s59
    %p63 = pneg %p57
    %p64 = scmp.eq.s32.totalorder %s22, 2
    %p65 = por %p63, %p64
    %p66 = scmp.ne.s32.totalorder %s58, %s61
    %p67 = scmp.eq.s32.totalorder %s22, 0
    %p68 = por %p66, %p67
    %p69 = scmp.ne.s32.totalorder %s58, %s61
    %p70 = scmp.eq.s32.totalorder %s27, 2
    %p71 = por %p69, %p70
    %p72 = scmp.ne.s32.totalorder %s61, %s62
    %p73 = scmp.eq.s32.totalorder %s27, 0
    %p74 = por %p72, %p73
    %p75 = scmp.ne.s32.totalorder %s61, %s62
    %p76 = scmp.eq.s32.totalorder %s28, 2
    %p77 = por %p75, %p76
    %p79 = scmp.ne.s32.totalorder %s62, %s78
    %p80 = scmp.eq.s32.totalorder %s28, 0
    %p81 = por %p79, %p80
    %s82 = ssub.s32 %s22, %s29
    %p83 = scmp.eq.s32.totalorder %s82, 0
    %s85 = sadd.s32 %s84, 1
    %s86 = scalar_select %p83, %s84, %s85
    %p89 = pneg %p83
    %p90 = scmp.eq.s32.totalorder %s22, 2
    %p91 = por %p89, %p90
    %p92 = scmp.ne.s32.totalorder %s84, %s87
    %p93 = scmp.eq.s32.totalorder %s22, 0
    %p94 = por %p92, %p93
    %p95 = scmp.ne.s32.totalorder %s84, %s87
    %p96 = scmp.eq.s32.totalorder %s27, 2
    %p97 = por %p95, %p96
    %p98 = scmp.ne.s32.totalorder %s87, %s88
    %p99 = scmp.eq.s32.totalorder %s27, 0
    %p100 = por %p98, %p99
    %p101 = scmp.ne.s32.totalorder %s87, %s88
    %p102 = scmp.eq.s32.totalorder %s28, 2
    %p103 = por %p101, %p102
    %p105 = scmp.ne.s32.totalorder %s88, %s104
    %p106 = scmp.eq.s32.totalorder %s28, 0
    %p107 = por %p105, %p106
    %s109 = sadd.s32 %s108, 1
    %p112 = scmp.eq.s32.totalorder %s22, 2
    %p113 = scmp.ne.s32.totalorder %s108, %s110
    %p114 = scmp.eq.s32.totalorder %s22, 0
    %p115 = por %p113, %p114
    %p116 = scmp.ne.s32.totalorder %s108, %s110
    %p117 = scmp.eq.s32.totalorder %s27, 2
    %p118 = por %p116, %p117
    %p119 = scmp.ne.s32.totalorder %s110, %s111
    %p120 = scmp.eq.s32.totalorder %s27, 0
    %p121 = por %p119, %p120
    %p122 = scmp.ne.s32.totalorder %s110, %s111
    %p123 = scmp.eq.s32.totalorder %s28, 2
    %p124 = por %p122, %p123
    %p126 = scmp.ne.s32.totalorder %s111, %s125
    %p127 = scmp.eq.s32.totalorder %s28, 0
    %p128 = por %p126, %p127
    %s130 = sadd.s32 %s129, 1
    %p133 = scmp.eq.s32.totalorder %s22, 2
    %p134 = scmp.ne.s32.totalorder %s129, %s131
    %p135 = scmp.eq.s32.totalorder %s22, 0
    %p136 = por %p134, %p135
    %p137 = scmp.ne.s32.totalorder %s129, %s131
    %p138 = scmp.eq.s32.totalorder %s27, 2
    %p139 = por %p137, %p138
    %p140 = scmp.ne.s32.totalorder %s131, %s132
    %p141 = scmp.eq.s32.totalorder %s27, 0
    %p142 = por %p140, %p141
    %p143 = scmp.ne.s32.totalorder %s131, %s132
    %p144 = scmp.eq.s32.totalorder %s28, 2
    %p145 = por %p143, %p144
    %p147 = scmp.ne.s32.totalorder %s132, %s146
    %p148 = scmp.eq.s32.totalorder %s28, 0
    %p149 = por %p147, %p148
    %s151 = sadd.s32 %s150, 1
    %p154 = scmp.eq.s32.totalorder %s22, 2
    %p155 = scmp.ne.s32.totalorder %s150, %s152
    %p156 = scmp.eq.s32.totalorder %s22, 0
    %p157 = por %p155, %p156
    %p158 = scmp.ne.s32.totalorder %s150, %s152
    %p159 = scmp.eq.s32.totalorder %s27, 2
    %p160 = por %p158, %p159
    %p161 = scmp.ne.s32.totalorder %s152, %s153
    %p162 = scmp.eq.s32.totalorder %s27, 0
    %p163 = por %p161, %p162
    %p164 = scmp.ne.s32.totalorder %s152, %s153
    %p165 = scmp.eq.s32.totalorder %s28, 2
    %p166 = por %p164, %p165
    %p168 = scmp.ne.s32.totalorder %s153, %s167
    %p169 = scmp.eq.s32.totalorder %s28, 0
    %p170 = por %p168, %p169
    %s172 = sadd.s32 %s171, 1
    %p175 = scmp.eq.s32.totalorder %s22, 2
    %p176 = scmp.ne.s32.totalorder %s171, %s173
    %p177 = scmp.eq.s32.totalorder %s22, 0
    %p178 = por %p176, %p177
    %p179 = scmp.ne.s32.totalorder %s171, %s173
    %p180 = scmp.eq.s32.totalorder %s27, 2
    %p181 = por %p179, %p180
    %p182 = scmp.ne.s32.totalorder %s173, %s174
    %p183 = scmp.eq.s32.totalorder %s27, 0
    %p184 = por %p182, %p183
    %p185 = scmp.ne.s32.totalorder %s173, %s174
    %p186 = scmp.eq.s32.totalorder %s28, 2
    %p187 = por %p185, %p186
    %p189 = scmp.ne.s32.totalorder %s174, %s188
    %p190 = scmp.eq.s32.totalorder %s28, 0
    %p191 = por %p189, %p190
    %s193 = sadd.s32 %s192, 1
    %p196 = scmp.eq.s32.totalorder %s22, 2
    %p197 = scmp.ne.s32.totalorder %s192, %s194
    %p198 = scmp.eq.s32.totalorder %s22, 0
    %p199 = por %p197, %p198
    %p200 = scmp.ne.s32.totalorder %s192, %s194
    %p201 = scmp.eq.s32.totalorder %s27, 2
    %p202 = por %p200, %p201
    %p203 = scmp.ne.s32.totalorder %s194, %s195
    %p204 = scmp.eq.s32.totalorder %s27, 0
    %p205 = por %p203, %p204
    %p206 = scmp.ne.s32.totalorder %s194, %s195
    %p207 = scmp.eq.s32.totalorder %s28, 2
    %p208 = por %p206, %p207
    %p210 = scmp.ne.s32.totalorder %s195, %s209
    %p211 = scmp.eq.s32.totalorder %s28, 0
    %p212 = por %p210, %p211
    %s214 = sadd.s32 %s213, 1
    %p217 = scmp.eq.s32.totalorder %s22, 2
    %p218 = scmp.ne.s32.totalorder %s213, %s215
    %p219 = scmp.eq.s32.totalorder %s22, 0
    %p220 = por %p218, %p219
    %p221 = scmp.ne.s32.totalorder %s213, %s215
    %p222 = scmp.eq.s32.totalorder %s27, 2
    %p223 = por %p221, %p222
    %p224 = scmp.ne.s32.totalorder %s215, %s216
    %p225 = scmp.eq.s32.totalorder %s27, 0
    %p226 = por %p224, %p225
    %p227 = scmp.ne.s32.totalorder %s215, %s216
    %p228 = scmp.eq.s32.totalorder %s28, 2
    %p229 = por %p227, %p228
    %p231 = scmp.ne.s32.totalorder %s216, %s230
    %p232 = scmp.eq.s32.totalorder %s28, 0
    %p233 = por %p231, %p232
    %s235 = sadd.s32 %s234, 1
    %p238 = scmp.eq.s32.totalorder %s22, 2
    %p239 = scmp.ne.s32.totalorder %s234, %s236
    %p240 = scmp.eq.s32.totalorder %s22, 0
    %p241 = por %p239, %p240
    %p242 = scmp.ne.s32.totalorder %s234, %s236
    %p243 = scmp.eq.s32.totalorder %s27, 2
    %p244 = por %p242, %p243
    %p245 = scmp.ne.s32.totalorder %s236, %s237
    %p246 = scmp.eq.s32.totalorder %s27, 0
    %p247 = por %p245, %p246
    %p248 = scmp.ne.s32.totalorder %s236, %s237
    %p249 = scmp.eq.s32.totalorder %s28, 2
    %p250 = por %p248, %p249
    %p252 = scmp.ne.s32.totalorder %s237, %s251
    %p253 = scmp.eq.s32.totalorder %s28, 0
    %p254 = por %p252, %p253
    %s256 = sadd.s32 %s255, 1
    %p259 = scmp.eq.s32.totalorder %s22, 2
    %p260 = scmp.ne.s32.totalorder %s255, %s257
    %p261 = scmp.eq.s32.totalorder %s22, 0
    %p262 = por %p260, %p261
    %p263 = scmp.ne.s32.totalorder %s255, %s257
    %p264 = scmp.eq.s32.totalorder %s27, 2
    %p265 = por %p263, %p264
    %p266 = scmp.ne.s32.totalorder %s257, %s258
    %p267 = scmp.eq.s32.totalorder %s27, 0
    %p268 = por %p266, %p267
    %p269 = scmp.ne.s32.totalorder %s257, %s258
    %p270 = scmp.eq.s32.totalorder %s28, 2
    %p271 = por %p269, %p270
    %p273 = scmp.ne.s32.totalorder %s258, %s272
    %p274 = scmp.eq.s32.totalorder %s28, 0
    %p275 = por %p273, %p274
    %s276 = ssub.s32 %s22, %s29
    %p277 = scmp.eq.s32.totalorder %s276, 0
    %s279 = sadd.s32 %s278, 1
    %s280 = scalar_select %p277, %s278, %s279
    %p283 = pneg %p277
    %p284 = scmp.eq.s32.totalorder %s22, 2
    %p285 = por %p283, %p284
    %p286 = scmp.ne.s32.totalorder %s278, %s281
    %p287 = scmp.eq.s32.totalorder %s22, 0
    %p288 = por %p286, %p287
    %p289 = scmp.ne.s32.totalorder %s278, %s281
    %p290 = scmp.eq.s32.totalorder %s27, 2
    %p291 = por %p289, %p290
    %p292 = scmp.ne.s32.totalorder %s281, %s282
    %p293 = scmp.eq.s32.totalorder %s27, 0
    %p294 = por %p292, %p293
    %p295 = scmp.ne.s32.totalorder %s281, %s282
    %p296 = scmp.eq.s32.totalorder %s28, 2
    %p297 = por %p295, %p296
    %p299 = scmp.ne.s32.totalorder %s282, %s298
    %p300 = scmp.eq.s32.totalorder %s28, 0
    %p301 = por %p299, %p300
    %s302 = ssub.s32 %s22, %s29
    %p303 = scmp.eq.s32.totalorder %s302, 0
    %s305 = sadd.s32 %s304, 1
    %s306 = scalar_select %p303, %s304, %s305
    %p309 = pneg %p303
    %p310 = scmp.eq.s32.totalorder %s22, 2
    %p311 = por %p309, %p310
    %p312 = scmp.ne.s32.totalorder %s304, %s307
    %p313 = scmp.eq.s32.totalorder %s22, 0
    %p314 = por %p312, %p313
    %p315 = scmp.ne.s32.totalorder %s304, %s307
    %p316 = scmp.eq.s32.totalorder %s27, 2
    %p317 = por %p315, %p316
    %p318 = scmp.ne.s32.totalorder %s307, %s308
    %p319 = scmp.eq.s32.totalorder %s27, 0
    %p320 = por %p318, %p319
    %p321 = scmp.ne.s32.totalorder %s307, %s308
    %p322 = scmp.eq.s32.totalorder %s28, 2
    %p323 = por %p321, %p322
    %p325 = scmp.ne.s32.totalorder %s308, %s324
    %p326 = scmp.eq.s32.totalorder %s28, 0
    %p327 = por %p325, %p326
    %s328 = ssub.s32 %s22, %s29
    %p329 = scmp.eq.s32.totalorder %s328, 0
    %s331 = sadd.s32 %s330, 1
    %s332 = scalar_select %p329, %s330, %s331
    %p335 = pneg %p329
    %p336 = scmp.eq.s32.totalorder %s22, 2
    %p337 = por %p335, %p336
    %p338 = scmp.ne.s32.totalorder %s330, %s333
    %p339 = scmp.eq.s32.totalorder %s22, 0
    %p340 = por %p338, %p339
    %p341 = scmp.ne.s32.totalorder %s330, %s333
    %p342 = scmp.eq.s32.totalorder %s27, 2
    %p343 = por %p341, %p342
    %p344 = scmp.ne.s32.totalorder %s333, %s334
    %p345 = scmp.eq.s32.totalorder %s27, 0
    %p346 = por %p344, %p345
    %p347 = scmp.ne.s32.totalorder %s333, %s334
    %p348 = scmp.eq.s32.totalorder %s28, 2
    %p349 = por %p347, %p348
    %p351 = scmp.ne.s32.totalorder %s334, %s350
    %p352 = scmp.eq.s32.totalorder %s28, 0
    %p353 = por %p351, %p352
    %p354 = scmp.le.s32.totalorder 1, %s22
    %p355 = scmp.lt.s32.totalorder %s22, 4
    %p356 = pnand %p354, %p355
    %p357 = pneg %p356
    // Predicated region
    $region9: #{tpu_custom_call.1} parent=5 // pred_check
      _
    $region10: #{tpu_custom_call.1} parent=5 // pred_check_branch
      %359 = sbr.rel (%p356) target = $region12
    $region11: #{tpu_custom_call.1} parent=5 // pred_region
      %s360 = ssub.s32 %s22, 1
      // Predicated region
      $region13: #{tpu_custom_call.1} parent=11 // pred_check
        %p361 = pneg %p121
      $region14: #{tpu_custom_call.1} parent=11 // pred_check_branch
        %363 = sbr.rel (%p361) target = $region16
      $region15: #{tpu_custom_call.1} parent=11 // pred_region
        _
      $region16: #{tpu_custom_call.1} parent=11 // pred_fallthru
        _
      // Predicated region
      $region17: #{tpu_custom_call.1} parent=11 // pred_check
        %p364 = pneg %p142
      $region18: #{tpu_custom_call.1} parent=11 // pred_check_branch
        %366 = sbr.rel (%p364) target = $region20
      $region19: #{tpu_custom_call.1} parent=11 // pred_region
        _
      $region20: #{tpu_custom_call.1} parent=11 // pred_fallthru
        _
      // Predicated region
      $region21: #{tpu_custom_call.1} parent=11 // pred_check
        %p367 = pneg %p163
      $region22: #{tpu_custom_call.1} parent=11 // pred_check_branch
        %369 = sbr.rel (%p367) target = $region24
      $region23: #{tpu_custom_call.1} parent=11 // pred_region
        _
      $region24: #{tpu_custom_call.1} parent=11 // pred_fallthru
        _
      // Predicated region
      $region25: #{tpu_custom_call.1} parent=11 // pred_check
        %p370 = pneg %p184
      $region26: #{tpu_custom_call.1} parent=11 // pred_check_branch
        %372 = sbr.rel (%p370) target = $region28
      $region27: #{tpu_custom_call.1} parent=11 // pred_region
        _
      $region28: #{tpu_custom_call.1} parent=11 // pred_fallthru
        _
      // Predicated region
      $region29: #{tpu_custom_call.1} parent=11 // pred_check
        %p373 = pneg %p205
      $region30: #{tpu_custom_call.1} parent=11 // pred_check_branch
        %375 = sbr.rel (%p373) target = $region32
      $region31: #{tpu_custom_call.1} parent=11 // pred_region
        _
      $region32: #{tpu_custom_call.1} parent=11 // pred_fallthru
        _
      // Predicated region
      $region33: #{tpu_custom_call.1} parent=11 // pred_check
        %p376 = pneg %p226
      $region34: #{tpu_custom_call.1} parent=11 // pred_check_branch
        %378 = sbr.rel (%p376) target = $region36
      $region35: #{tpu_custom_call.1} parent=11 // pred_region
        _
      $region36: #{tpu_custom_call.1} parent=11 // pred_fallthru
        _
      // Predicated region
      $region37: #{tpu_custom_call.1} parent=11 // pred_check
        %p379 = pneg %p247
      $region38: #{tpu_custom_call.1} parent=11 // pred_check_branch
        %381 = sbr.rel (%p379) target = $region40
      $region39: #{tpu_custom_call.1} parent=11 // pred_region
        _
      $region40: #{tpu_custom_call.1} parent=11 // pred_fallthru
        _
      // Predicated region
      $region41: #{tpu_custom_call.1} parent=11 // pred_check
        %p382 = pneg %p268
      $region42: #{tpu_custom_call.1} parent=11 // pred_check_branch
        %384 = sbr.rel (%p382) target = $region44
      $region43: #{tpu_custom_call.1} parent=11 // pred_region
        _
      $region44: #{tpu_custom_call.1} parent=11 // pred_fallthru
        _
    $region12: #{tpu_custom_call.1} parent=5 // pred_fallthru
      _
    %p385 = scmp.lt.s32.totalorder %s22, 3
    // Predicated region
    $region45: #{tpu_custom_call.1} parent=5 // pred_check
      %p386 = pneg %p385
    $region46: #{tpu_custom_call.1} parent=5 // pred_check_branch
      %388 = sbr.rel (%p386) target = $region48
    $region47: #{tpu_custom_call.1} parent=5 // pred_region
      // Predicated region
      $region49: #{tpu_custom_call.1} parent=47 // pred_check
        %p389 = pneg %p42
      $region50: #{tpu_custom_call.1} parent=47 // pred_check_branch
        %391 = sbr.rel (%p389) target = $region52
      $region51: #{tpu_custom_call.1} parent=47 // pred_region
        %s392 = smul.u32 2, %s22
        %p393 = scmp.lt.s32.totalorder %s392, 5
        %s394 = scalar_select %p393, %s392, 5
        %s395 = smul.addr %s394, 8
        %s396 = scalar_lea.vmem %s0, %s395
        %s397 = smul.u32 2, %s22
      $region52: #{tpu_custom_call.1} parent=47 // pred_fallthru
        _
      // Predicated region
      $region53: #{tpu_custom_call.1} parent=47 // pred_check
        %p398 = pneg %p68
      $region54: #{tpu_custom_call.1} parent=47 // pred_check_branch
        %400 = sbr.rel (%p398) target = $region56
      $region55: #{tpu_custom_call.1} parent=47 // pred_region
        %s401 = smul.u32 2, %s22
        %p402 = scmp.lt.s32.totalorder %s401, 5
        %s403 = scalar_select %p402, %s401, 5
        %s404 = smul.addr %s403, 8
        %s405 = scalar_lea.vmem %s1, %s404
        %s406 = smul.u32 2, %s22
      $region56: #{tpu_custom_call.1} parent=47 // pred_fallthru
        _
      // Predicated region
      $region57: #{tpu_custom_call.1} parent=47 // pred_check
        %p407 = pneg %p94
      $region58: #{tpu_custom_call.1} parent=47 // pred_check_branch
        %409 = sbr.rel (%p407) target = $region60
      $region59: #{tpu_custom_call.1} parent=47 // pred_region
        %s410 = smul.u32 2, %s22
        %p411 = scmp.lt.s32.totalorder %s410, 5
        %s412 = scalar_select %p411, %s410, 5
        %s413 = smul.addr %s412, 8
        %s414 = scalar_lea.vmem %s2, %s413
        %s415 = smul.u32 2, %s22
      $region60: #{tpu_custom_call.1} parent=47 // pred_fallthru
        _
    $region48: #{tpu_custom_call.1} parent=5 // pred_fallthru
      _
    %p416 = scmp.le.s32.totalorder 1, %s22
    %p417 = scmp.lt.s32.totalorder %s22, 4
    %p418 = pnand %p416, %p417
    %p419 = pneg %p418
    // Predicated region
    $region61: #{tpu_custom_call.1} parent=5 // pred_check
      _
    $region62: #{tpu_custom_call.1} parent=5 // pred_check_branch
      %421 = sbr.rel (%p418) target = $region64
    $region63: #{tpu_custom_call.1} parent=5 // pred_region
      %s422 = ssub.s32 %s22, 1
      %s423 = smul.u32 2, %s27
      %p424 = scmp.lt.s32.totalorder %s423, 5
      %s425 = scalar_select %p424, %s423, 5
      %s426 = smul.addr %s425, 8
      %s427 = scalar_lea.vmem %s0, %s426
      %p428 = pneg %p48
      %p429 = pneg %p45
      %s430 = smul.u32 2, %s27
      %p431 = scmp.lt.s32.totalorder %s430, 5
      %s432 = scalar_select %p431, %s430, 5
      %s433 = smul.addr %s432, 8
      %s434 = scalar_lea.vmem %s1, %s433
      %p435 = pneg %p74
      %p436 = pneg %p71
      %s437 = smul.u32 2, %s27
      %p438 = scmp.lt.s32.totalorder %s437, 5
      %s439 = scalar_select %p438, %s437, 5
      %s440 = smul.addr %s439, 8
      %s441 = scalar_lea.vmem %s2, %s440
      %p442 = pneg %p100
      %p443 = pneg %p97
      %p444 = pneg %p121
      %p445 = pneg %p118
      %p446 = pneg %p142
      %p447 = pneg %p139
      %p448 = pneg %p163
      %p449 = pneg %p160
      %p450 = pneg %p184
      %p451 = pneg %p181
      %p452 = pneg %p205
      %p453 = pneg %p202
      %p454 = pneg %p226
      %p455 = pneg %p223
      %p456 = pneg %p247
      %p457 = pneg %p244
      %p458 = pneg %p268
      %p459 = pneg %p265
      %p460 = pneg %p294
      %p461 = pneg %p291
      %s462 = smul.u32 2, %s27
      %p463 = scmp.lt.s32.totalorder %s462, 5
      %s464 = scalar_select %p463, %s462, 5
      %s465 = smul.addr %s464, 8
      %s466 = scalar_lea.vmem %s11, %s465
      %p467 = pneg %p320
      %p468 = pneg %p317
      %s469 = smul.u32 2, %s27
      %p470 = scmp.lt.s32.totalorder %s469, 5
      %s471 = scalar_select %p470, %s469, 5
      %s472 = smul.addr %s471, 8
      %s473 = scalar_lea.vmem %s12, %s472
      %p474 = pneg %p346
      %p475 = pneg %p343
      %s476 = smul.u32 2, %s27
      %p477 = scmp.lt.s32.totalorder %s476, 5
      %s478 = scalar_select %p477, %s476, 5
      %s479 = smul.addr %s478, 8
      %s480 = scalar_lea.vmem %s13, %s479
      %s481 = smul.u32 2, %s27
      %p482 = scmp.lt.s32.totalorder %s481, 5
      %s483 = scalar_select %p482, %s481, 5
      %s484 = smul.addr %s483, 8
      %s485 = scalar_lea.vmem %s0, %s484
      %s486 = smul.u32 2, %s27
      %s487 = smul.u32 2, %s27
      %p488 = scmp.lt.s32.totalorder %s487, 5
      %s489 = scalar_select %p488, %s487, 5
      %s490 = smul.addr %s489, 8
      %s491 = scalar_lea.vmem %s1, %s490
      %s492 = smul.u32 2, %s27
      %s493 = smul.u32 2, %s27
      %p494 = scmp.lt.s32.totalorder %s493, 5
      %s495 = scalar_select %p494, %s493, 5
      %s496 = smul.addr %s495, 8
      %s497 = scalar_lea.vmem %s2, %s496
      %s498 = smul.u32 2, %s27
      %s499 = smul.u32 2, %s27
      %p500 = scmp.lt.s32.totalorder %s499, 5
      %s501 = scalar_select %p500, %s499, 5
      %s502 = smul.addr %s501, 8
      %s503 = scalar_lea.vmem %s11, %s502
      %s504 = smul.u32 2, %s27
      %s505 = smul.u32 2, %s27
      %p506 = scmp.lt.s32.totalorder %s505, 5
      %s507 = scalar_select %p506, %s505, 5
      %s508 = smul.addr %s507, 8
      %s509 = scalar_lea.vmem %s12, %s508
      %s510 = smul.u32 2, %s27
      %s511 = smul.u32 2, %s27
      %p512 = scmp.lt.s32.totalorder %s511, 5
      %s513 = scalar_select %p512, %s511, 5
      %s514 = smul.addr %s513, 8
      %s515 = scalar_lea.vmem %s13, %s514
      %s516 = smul.u32 2, %s27
      %v517 = vld [vmem:[%s3] sm:$0xff]
      %v518 = vld [vmem:[%s3 + $0x8] sm:$0xff]
      %v519 = vld [vmem:[%s3 + $0x10] sm:$0xff]
      %v520 = vlaneseq
      %v521 = vand.u32 %v520, 127
      %v522 = vld [vmem:[%s491] sm:$0xff]
      %v523 = vld [vmem:[%s491 + $0x8] sm:$0xff]
      %524 = vset.pattern.permute.xlu0 0
      %525 = vperm.xlu0 %524, %v522
      %v526 = vpop.permute.xlu0 %525
      %527 = vset.pattern.permute.xlu0 0
      %528 = vperm.xlu0 %527, %v523
      %v529 = vpop.permute.xlu0 %528
      %vm530 = vcmp.eq.s32.totalorder %v526, %v521
      %vm531 = vcmp.eq.s32.totalorder %v529, %v521
      %v532 = vsel %vm530, 1, 0
      %v533 = vsel %vm531, 1, 0
      %v534 = vcvt.s32.f32 %v532
      %v535 = vcvt.s32.f32 %v533
      %v536 = vld [vmem:[%s497] sm:$0xff]
      %v537 = vld [vmem:[%s497 + $0x8] sm:$0xff]
      %538 = vset.pattern.permute.xlu0 0
      %539 = vperm.xlu0 %538, %v536
      %v540 = vpop.permute.xlu0 %539
      %541 = vset.pattern.permute.xlu0 0
      %542 = vperm.xlu0 %541, %v537
      %v543 = vpop.permute.xlu0 %542
      %vm544 = vcmp.eq.s32.totalorder %v540, %v521
      %vm545 = vcmp.eq.s32.totalorder %v543, %v521
      %v546 = vsel %vm544, 1, 0
      %v547 = vsel %vm545, 1, 0
      %v548 = vcvt.s32.f32 %v546
      %v549 = vcvt.s32.f32 %v547
      %vm550 = vcmask 195584
      %v552 = vsel %vm550, %v534, 0
      %v555 = vsel %vm550, %v535, 0
      %557 = vmatprep.subr.mxu0 0.0
      %558 = vmatpush1.msra.mxu0 %v517
      %559 = vmatprep.subr.mxu0 0.0
      %560 = vmatpush1.msra.mxu0 %v518
      %561 = vmatprep.subr.mxu0 0.0
      %562 = vmatpush1.msra.mxu0 %v519
      %563 = vmatprep.subr.mxu0 0.0
      %564 = vmatpush1.msra.mxu0 0.0
      %565 = vmatprep.subr.mxu0 0.0
      %566 = vmatpush1.msra.mxu0 0.0
      %567 = vmatprep.subr.mxu0 0.0
      %568 = vmatpush1.msra.mxu0 0.0
      %569 = vmatprep.subr.mxu0 0.0
      %570 = vmatpush1.msra.mxu0 0.0
      %571 = vmatprep.subr.mxu0 0.0
      %572 = vmatpush1.msra.mxu0 0.0
      %573 = vmatprep.subr.mxu0 0.0
      %574 = vmatpush1.msra.mxu0 0.0
      %575 = vmatprep.subr.mxu0 0.0
      %576 = vmatpush1.msra.mxu0 0.0
      %577 = vmatprep.subr.mxu0 0.0
      %578 = vmatpush1.msra.mxu0 0.0
      %579 = vmatprep.subr.mxu0 0.0
      %580 = vmatpush1.msra.mxu0 0.0
      %581 = vmatprep.subr.mxu0 0.0
      %582 = vmatpush1.msra.mxu0 0.0
      %583 = vmatprep.subr.mxu0 0.0
      %584 = vmatpush1.msra.mxu0 0.0
      %585 = vmatprep.subr.mxu0 0.0
      %586 = vmatpush1.msra.mxu0 0.0
      %587 = vmatprep.subr.mxu0 0.0
      %588 = vmatpush1.msra.mxu0 0.0
      %589 = vmatprep.subr.mxu0 0.0
      %590 = vmatpush1.msra.mxu0 0.0
      %591 = vmatprep.subr.mxu0 0.0
      %592 = vmatpush1.msra.mxu0 0.0
      %593 = vmatprep.subr.mxu0 0.0
      %594 = vmatpush1.msra.mxu0 0.0
      %595 = vmatprep.subr.mxu0 0.0
      %596 = vmatpush1.msra.mxu0 0.0
      %597 = vmatprep.subr.mxu0 0.0
      %598 = vmatpush1.msra.mxu0 0.0
      %599 = vmatprep.subr.mxu0 0.0
      %600 = vmatpush1.msra.mxu0 0.0
      %601 = vmatprep.subr.mxu0 0.0
      %602 = vmatpush1.msra.mxu0 0.0
      %603 = vmatprep.subr.mxu0 0.0
      %604 = vmatpush1.msra.mxu0 0.0
      %605 = vmatprep.subr.mxu0 0.0
      %606 = vmatpush1.msra.mxu0 0.0
      %607 = vmatprep.subr.mxu0 0.0
      %608 = vmatpush1.msra.mxu0 0.0
      %609 = vmatprep.subr.mxu0 0.0
      %610 = vmatpush1.msra.mxu0 0.0
      %611 = vmatprep.subr.mxu0 0.0
      %612 = vmatpush1.msra.mxu0 0.0
      %613 = vmatprep.subr.mxu0 0.0
      %614 = vmatpush1.msra.mxu0 0.0
      %615 = vmatprep.subr.mxu0 0.0
      %616 = vmatpush1.msra.mxu0 0.0
      %617 = vmatprep.subr.mxu0 0.0
      %618 = vmatpush1.msra.mxu0 0.0
      %619 = vmatprep.subr.mxu0 0.0
      %620 = vmatpush1.msra.mxu0 0.0
      %621 = vmatprep.mubr.f32.mxu0 0.0
      %622 = vmatmul.mubr.f32.gmra.mrb[0].mxu0 %v552
      %v623 = vpop.f32.mrb[0].mxu0
      %v624 = vadd.f32 0.0, %v623
      %v625 = vpop.f32.mrb[0].mxu0
      %626 = vmatprep.mubr.f32.mxu0 0.0
      %627 = vmatmul.mubr.f32.gmra.mrb[0].mxu0 %v555
      %v628 = vpop.f32.mrb[0].mxu0
      %v629 = vadd.f32 0.0, %v628
      %v630 = vpop.f32.mrb[0].mxu0
      %631 = vdwg.mxu0
      %v633 = vsel %vm550, %v548, 0
      %v636 = vsel %vm550, %v549, 0
      %638 = vmatprep.subr.mxu0 0.0
      %639 = vmatpush1.msra.mxu0 %v517
      %640 = vmatprep.subr.mxu0 0.0
      %641 = vmatpush1.msra.mxu0 %v518
      %642 = vmatprep.subr.mxu0 0.0
      %643 = vmatpush1.msra.mxu0 %v519
      %644 = vmatprep.subr.mxu0 0.0
      %645 = vmatpush1.msra.mxu0 0.0
      %646 = vmatprep.subr.mxu0 0.0
      %647 = vmatpush1.msra.mxu0 0.0
      %648 = vmatprep.subr.mxu0 0.0
      %649 = vmatpush1.msra.mxu0 0.0
      %650 = vmatprep.subr.mxu0 0.0
      %651 = vmatpush1.msra.mxu0 0.0
      %652 = vmatprep.subr.mxu0 0.0
      %653 = vmatpush1.msra.mxu0 0.0
      %654 = vmatprep.subr.mxu0 0.0
      %655 = vmatpush1.msra.mxu0 0.0
      %656 = vmatprep.subr.mxu0 0.0
      %657 = vmatpush1.msra.mxu0 0.0
      %658 = vmatprep.subr.mxu0 0.0
      %659 = vmatpush1.msra.mxu0 0.0
      %660 = vmatprep.subr.mxu0 0.0
      %661 = vmatpush1.msra.mxu0 0.0
      %662 = vmatprep.subr.mxu0 0.0
      %663 = vmatpush1.msra.mxu0 0.0
      %664 = vmatprep.subr.mxu0 0.0
      %665 = vmatpush1.msra.mxu0 0.0
      %666 = vmatprep.subr.mxu0 0.0
      %667 = vmatpush1.msra.mxu0 0.0
      %668 = vmatprep.subr.mxu0 0.0
      %669 = vmatpush1.msra.mxu0 0.0
      %670 = vmatprep.subr.mxu0 0.0
      %671 = vmatpush1.msra.mxu0 0.0
      %672 = vmatprep.subr.mxu0 0.0
      %673 = vmatpush1.msra.mxu0 0.0
      %674 = vmatprep.subr.mxu0 0.0
      %675 = vmatpush1.msra.mxu0 0.0
      %676 = vmatprep.subr.mxu0 0.0
      %677 = vmatpush1.msra.mxu0 0.0
      %678 = vmatprep.subr.mxu0 0.0
      %679 = vmatpush1.msra.mxu0 0.0
      %680 = vmatprep.subr.mxu0 0.0
      %681 = vmatpush1.msra.mxu0 0.0
      %682 = vmatprep.subr.mxu0 0.0
      %683 = vmatpush1.msra.mxu0 0.0
      %684 = vmatprep.subr.mxu0 0.0
      %685 = vmatpush1.msra.mxu0 0.0
      %686 = vmatprep.subr.mxu0 0.0
      %687 = vmatpush1.msra.mxu0 0.0
      %688 = vmatprep.subr.mxu0 0.0
      %689 = vmatpush1.msra.mxu0 0.0
      %690 = vmatprep.subr.mxu0 0.0
      %691 = vmatpush1.msra.mxu0 0.0
      %692 = vmatprep.subr.mxu0 0.0
      %693 = vmatpush1.msra.mxu0 0.0
      %694 = vmatprep.subr.mxu0 0.0
      %695 = vmatpush1.msra.mxu0 0.0
      %696 = vmatprep.subr.mxu0 0.0
      %697 = vmatpush1.msra.mxu0 0.0
      %698 = vmatprep.subr.mxu0 0.0
      %699 = vmatpush1.msra.mxu0 0.0
      %700 = vmatprep.subr.mxu0 0.0
      %701 = vmatpush1.msra.mxu0 0.0
      %702 = vmatprep.mubr.f32.mxu0 0.0
      %703 = vmatmul.mubr.f32.gmra.mrb[0].mxu0 %v633
      %v704 = vpop.f32.mrb[0].mxu0
      %v705 = vadd.f32 0.0, %v704
      %v706 = vpop.f32.mrb[0].mxu0
      %707 = vmatprep.mubr.f32.mxu0 0.0
      %708 = vmatmul.mubr.f32.gmra.mrb[0].mxu0 %v636
      %v709 = vpop.f32.mrb[0].mxu0
      %v710 = vadd.f32 0.0, %v709
      %v711 = vpop.f32.mrb[0].mxu0
      %712 = vdwg.mxu0
      %v713 = vld [vmem:[%s4] sm:$0xff]
      %v714 = vld [vmem:[%s5] sm:$0xff]
      %vm715 = vcmask 64512
      %v717 = vsel %vm715, %v705, 0
      %v720 = vsel %vm715, %v710, 0
      %722 = vmatprep.subr.mxu0 0.0
      %723 = vmatpush1.msra.mxu0 %v714
      %724 = vmatprep.subr.mxu0 0.0
      %725 = vmatpush1.msra.mxu0 0.0
      %726 = vmatprep.subr.mxu0 0.0
      %727 = vmatpush1.msra.mxu0 0.0
      %728 = vmatprep.subr.mxu0 0.0
      %729 = vmatpush1.msra.mxu0 0.0
      %730 = vmatprep.subr.mxu0 0.0
      %731 = vmatpush1.msra.mxu0 0.0
      %732 = vmatprep.subr.mxu0 0.0
      %733 = vmatpush1.msra.mxu0 0.0
      %734 = vmatprep.subr.mxu0 0.0
      %735 = vmatpush1.msra.mxu0 0.0
      %736 = vmatprep.subr.mxu0 0.0
      %737 = vmatpush1.msra.mxu0 0.0
      %738 = vmatprep.subr.mxu0 0.0
      %739 = vmatpush1.msra.mxu0 0.0
      %740 = vmatprep.subr.mxu0 0.0
      %741 = vmatpush1.msra.mxu0 0.0
      %742 = vmatprep.subr.mxu0 0.0
      %743 = vmatpush1.msra.mxu0 0.0
      %744 = vmatprep.subr.mxu0 0.0
      %745 = vmatpush1.msra.mxu0 0.0
      %746 = vmatprep.subr.mxu0 0.0
      %747 = vmatpush1.msra.mxu0 0.0
      %748 = vmatprep.subr.mxu0 0.0
      %749 = vmatpush1.msra.mxu0 0.0
      %750 = vmatprep.subr.mxu0 0.0
      %751 = vmatpush1.msra.mxu0 0.0
      %752 = vmatprep.subr.mxu0 0.0
      %753 = vmatpush1.msra.mxu0 0.0
      %754 = vmatprep.subr.mxu0 0.0
      %755 = vmatpush1.msra.mxu0 0.0
      %756 = vmatprep.subr.mxu0 0.0
      %757 = vmatpush1.msra.mxu0 0.0
      %758 = vmatprep.subr.mxu0 0.0
      %759 = vmatpush1.msra.mxu0 0.0
      %760 = vmatprep.subr.mxu0 0.0
      %761 = vmatpush1.msra.mxu0 0.0
      %762 = vmatprep.subr.mxu0 0.0
      %763 = vmatpush1.msra.mxu0 0.0
      %764 = vmatprep.subr.mxu0 0.0
      %765 = vmatpush1.msra.mxu0 0.0
      %766 = vmatprep.subr.mxu0 0.0
      %767 = vmatpush1.msra.mxu0 0.0
      %768 = vmatprep.subr.mxu0 0.0
      %769 = vmatpush1.msra.mxu0 0.0
      %770 = vmatprep.subr.mxu0 0.0
      %771 = vmatpush1.msra.mxu0 0.0
      %772 = vmatprep.subr.mxu0 0.0
      %773 = vmatpush1.msra.mxu0 0.0
      %774 = vmatprep.subr.mxu0 0.0
      %775 = vmatpush1.msra.mxu0 0.0
      %776 = vmatprep.subr.mxu0 0.0
      %777 = vmatpush1.msra.mxu0 0.0
      %778 = vmatprep.subr.mxu0 0.0
      %779 = vmatpush1.msra.mxu0 0.0
      %780 = vmatprep.subr.mxu0 0.0
      %781 = vmatpush1.msra.mxu0 0.0
      %782 = vmatprep.subr.mxu0 0.0
      %783 = vmatpush1.msra.mxu0 0.0
      %784 = vmatprep.subr.mxu0 0.0
      %785 = vmatpush1.msra.mxu0 0.0
      %786 = vmatprep.mubr.f32.mxu0 0.0
      %787 = vmatmul.mubr.f32.gmra.mrb[0].mxu0 %v717
      %v788 = vpop.f32.mrb[0].mxu0
      %v789 = vadd.f32 0.0, %v788
      %v790 = vpop.f32.mrb[0].mxu0
      %791 = vmatprep.mubr.f32.mxu0 0.0
      %792 = vmatmul.mubr.f32.gmra.mrb[0].mxu0 %v720
      %v793 = vpop.f32.mrb[0].mxu0
      %v794 = vadd.f32 0.0, %v793
      %v795 = vpop.f32.mrb[0].mxu0
      %796 = vdwg.mxu0
      %v798 = vsel %vm715, %v624, 0
      %v801 = vsel %vm715, %v629, 0
      %803 = vmatprep.subr.mxu0 0.0
      %804 = vmatpush1.msra.mxu0 %v713
      %805 = vmatprep.subr.mxu0 0.0
      %806 = vmatpush1.msra.mxu0 0.0
      %807 = vmatprep.subr.mxu0 0.0
      %808 = vmatpush1.msra.mxu0 0.0
      %809 = vmatprep.subr.mxu0 0.0
      %810 = vmatpush1.msra.mxu0 0.0
      %811 = vmatprep.subr.mxu0 0.0
      %812 = vmatpush1.msra.mxu0 0.0
      %813 = vmatprep.subr.mxu0 0.0
      %814 = vmatpush1.msra.mxu0 0.0
      %815 = vmatprep.subr.mxu0 0.0
      %816 = vmatpush1.msra.mxu0 0.0
      %817 = vmatprep.subr.mxu0 0.0
      %818 = vmatpush1.msra.mxu0 0.0
      %819 = vmatprep.subr.mxu0 0.0
      %820 = vmatpush1.msra.mxu0 0.0
      %821 = vmatprep.subr.mxu0 0.0
      %822 = vmatpush1.msra.mxu0 0.0
      %823 = vmatprep.subr.mxu0 0.0
      %824 = vmatpush1.msra.mxu0 0.0
      %825 = vmatprep.subr.mxu0 0.0
      %826 = vmatpush1.msra.mxu0 0.0
      %827 = vmatprep.subr.mxu0 0.0
      %828 = vmatpush1.msra.mxu0 0.0
      %829 = vmatprep.subr.mxu0 0.0
      %830 = vmatpush1.msra.mxu0 0.0
      %831 = vmatprep.subr.mxu0 0.0
      %832 = vmatpush1.msra.mxu0 0.0
      %833 = vmatprep.subr.mxu0 0.0
      %834 = vmatpush1.msra.mxu0 0.0
      %835 = vmatprep.subr.mxu0 0.0
      %836 = vmatpush1.msra.mxu0 0.0
      %837 = vmatprep.subr.mxu0 0.0
      %838 = vmatpush1.msra.mxu0 0.0
      %839 = vmatprep.subr.mxu0 0.0
      %840 = vmatpush1.msra.mxu0 0.0
      %841 = vmatprep.subr.mxu0 0.0
      %842 = vmatpush1.msra.mxu0 0.0
      %843 = vmatprep.subr.mxu0 0.0
      %844 = vmatpush1.msra.mxu0 0.0
      %845 = vmatprep.subr.mxu0 0.0
      %846 = vmatpush1.msra.mxu0 0.0
      %847 = vmatprep.subr.mxu0 0.0
      %848 = vmatpush1.msra.mxu0 0.0
      %849 = vmatprep.subr.mxu0 0.0
      %850 = vmatpush1.msra.mxu0 0.0
      %851 = vmatprep.subr.mxu0 0.0
      %852 = vmatpush1.msra.mxu0 0.0
      %853 = vmatprep.subr.mxu0 0.0
      %854 = vmatpush1.msra.mxu0 0.0
      %855 = vmatprep.subr.mxu0 0.0
      %856 = vmatpush1.msra.mxu0 0.0
      %857 = vmatprep.subr.mxu0 0.0
      %858 = vmatpush1.msra.mxu0 0.0
      %859 = vmatprep.subr.mxu0 0.0
      %860 = vmatpush1.msra.mxu0 0.0
      %861 = vmatprep.subr.mxu0 0.0
      %862 = vmatpush1.msra.mxu0 0.0
      %863 = vmatprep.subr.mxu0 0.0
      %864 = vmatpush1.msra.mxu0 0.0
      %865 = vmatprep.subr.mxu0 0.0
      %866 = vmatpush1.msra.mxu0 0.0
      %867 = vmatprep.mubr.f32.mxu0 0.0
      %868 = vmatmul.mubr.f32.gmra.mrb[0].mxu0 %v798
      %v869 = vpop.f32.mrb[0].mxu0
      %v870 = vadd.f32 %v789, %v869
      %v871 = vpop.f32.mrb[0].mxu0
      %872 = vmatprep.mubr.f32.mxu0 0.0
      %873 = vmatmul.mubr.f32.gmra.mrb[0].mxu0 %v801
      %v874 = vpop.f32.mrb[0].mxu0
      %v875 = vadd.f32 %v794, %v874
      %v876 = vpop.f32.mrb[0].mxu0
      %877 = vdwg.mxu0
      %v878 = vld [vmem:[#allocation2] sm:$0x1]
      %v880 = vlaneseq
      %v881 = vshrl.u32 %v880, 7
      %v882 = vsub.s32 0, %v881
      %v883 = vrot.slane %v878, %v882
      %v885 = vadd.f32 %v870, %v883
      %v886 = vadd.f32 %v875, %v883
      %vm887 = vcmp.gt.f32.partialorder %v885, 0.0
      %vm888 = vcmp.gt.f32.partialorder %v886, 0.0
      %v889 = vmul.f32 %v885, 0.01
      %v890 = vmul.f32 %v886, 0.01
      %v891 = vsel %vm887, %v885, %v889
      %v892 = vsel %vm888, %v886, %v890
      %vm893 = vcmask 7168
      %894 = vst.msk [vmem:[%s503] sm:$0xff] %vm893, %v891
      %895 = vst.msk [vmem:[%s503 + $0x8] sm:$0xff] %vm893, %v892
      %v896 = vld [vmem:[%s485] sm:$0xff]
      %v897 = vld [vmem:[%s485 + $0x8] sm:$0xff]
      %v898 = vld [vmem:[%s7] sm:$0xf]
      %v899 = vld [vmem:[%s8] sm:$0x1]
      %v901 = vlaneseq
      %v902 = vshrl.u32 %v901, 7
      %v903 = vsub.s32 0, %v902
      %v904 = vrot.slane %v899, %v903
      %vm906 = vcmask 31744
      %v908 = vsel %vm906, %v896, 0
      %v911 = vsel %vm906, %v897, 0
      %vm913 = vcmask 1043456
      %v915 = vsel %vm913, %v898, 0
      %917 = vmatprep.subr.mxu0 0.0
      %918 = vmatpush1.msra.mxu0 %v915
      %919 = vmatprep.subr.mxu0 0.0
      %920 = vmatpush1.msra.mxu0 0.0
      %921 = vmatprep.subr.mxu0 0.0
      %922 = vmatpush1.msra.mxu0 0.0
      %923 = vmatprep.subr.mxu0 0.0
      %924 = vmatpush1.msra.mxu0 0.0
      %925 = vmatprep.subr.mxu0 0.0
      %926 = vmatpush1.msra.mxu0 0.0
      %927 = vmatprep.subr.mxu0 0.0
      %928 = vmatpush1.msra.mxu0 0.0
      %929 = vmatprep.subr.mxu0 0.0
      %930 = vmatpush1.msra.mxu0 0.0
      %931 = vmatprep.subr.mxu0 0.0
      %932 = vmatpush1.msra.mxu0 0.0
      %933 = vmatprep.subr.mxu0 0.0
      %934 = vmatpush1.msra.mxu0 0.0
      %935 = vmatprep.subr.mxu0 0.0
      %936 = vmatpush1.msra.mxu0 0.0
      %937 = vmatprep.subr.mxu0 0.0
      %938 = vmatpush1.msra.mxu0 0.0
      %939 = vmatprep.subr.mxu0 0.0
      %940 = vmatpush1.msra.mxu0 0.0
      %941 = vmatprep.subr.mxu0 0.0
      %942 = vmatpush1.msra.mxu0 0.0
      %943 = vmatprep.subr.mxu0 0.0
      %944 = vmatpush1.msra.mxu0 0.0
      %945 = vmatprep.subr.mxu0 0.0
      %946 = vmatpush1.msra.mxu0 0.0
      %947 = vmatprep.subr.mxu0 0.0
      %948 = vmatpush1.msra.mxu0 0.0
      %949 = vmatprep.subr.mxu0 0.0
      %950 = vmatpush1.msra.mxu0 0.0
      %951 = vmatprep.subr.mxu0 0.0
      %952 = vmatpush1.msra.mxu0 0.0
      %953 = vmatprep.subr.mxu0 0.0
      %954 = vmatpush1.msra.mxu0 0.0
      %955 = vmatprep.subr.mxu0 0.0
      %956 = vmatpush1.msra.mxu0 0.0
      %957 = vmatprep.subr.mxu0 0.0
      %958 = vmatpush1.msra.mxu0 0.0
      %959 = vmatprep.subr.mxu0 0.0
      %960 = vmatpush1.msra.mxu0 0.0
      %961 = vmatprep.subr.mxu0 0.0
      %962 = vmatpush1.msra.mxu0 0.0
      %963 = vmatprep.subr.mxu0 0.0
      %964 = vmatpush1.msra.mxu0 0.0
      %965 = vmatprep.subr.mxu0 0.0
      %966 = vmatpush1.msra.mxu0 0.0
      %967 = vmatprep.subr.mxu0 0.0
      %968 = vmatpush1.msra.mxu0 0.0
      %969 = vmatprep.subr.mxu0 0.0
      %970 = vmatpush1.msra.mxu0 0.0
      %971 = vmatprep.subr.mxu0 0.0
      %972 = vmatpush1.msra.mxu0 0.0
      %973 = vmatprep.subr.mxu0 0.0
      %974 = vmatpush1.msra.mxu0 0.0
      %975 = vmatprep.subr.mxu0 0.0
      %976 = vmatpush1.msra.mxu0 0.0
      %977 = vmatprep.subr.mxu0 0.0
      %978 = vmatpush1.msra.mxu0 0.0
      %979 = vmatprep.subr.mxu0 0.0
      %980 = vmatpush1.msra.mxu0 0.0
      %981 = vmatprep.mubr.f32.mxu0 0.0
      %982 = vmatmul.mubr.f32.gmra.mrb[0].mxu0 %v908
      %v983 = vpop.f32.mrb[0].mxu0
      %v984 = vadd.f32 %v904, %v983
      %v985 = vpop.f32.mrb[0].mxu0
      %986 = vmatprep.mubr.f32.mxu0 0.0
      %987 = vmatmul.mubr.f32.gmra.mrb[0].mxu0 %v911
      %v988 = vpop.f32.mrb[0].mxu0
      %v989 = vadd.f32 %v904, %v988
      %v990 = vpop.f32.mrb[0].mxu0
      %991 = vdwg.mxu0
      %992 = vset.pattern.permute.xlu0 0
      %993 = vperm.xlu0 %992, %v624
      %v994 = vpop.permute.xlu0 %993
      %996 = vset.pattern.permute.xlu0 0
      %997 = vperm.xlu0 %996, %v629
      %v998 = vpop.permute.xlu0 %997
      %v1000 = vmul.f32 %v994, %v984
      %v1001 = vmul.f32 %v998, %v989
      %v1002 = vadd.f32 %v1000, 0.0
      %v1003 = vadd.f32 %v1001, 0.0
      %1004 = vset.pattern.permute.xlu0 1
      %1005 = vperm.xlu0 %1004, %v624
      %v1006 = vpop.permute.xlu0 %1005
      %1008 = vset.pattern.permute.xlu0 1
      %1009 = vperm.xlu0 %1008, %v629
      %v1010 = vpop.permute.xlu0 %1009
      %v1012 = vmul.f32 %v1006, %v984
      %v1013 = vmul.f32 %v1010, %v989
      %1016 = vrot.lane.b32.xlu0 %v1012, 120
      %v1017 = vpop.permute.xlu0 %1016
      %1018 = vrot.lane.b32.xlu0 %v1013, 120
      %v1019 = vpop.permute.xlu0 %1018
      %v1022 = vadd.f32 %v1002, %v1017
      %v1023 = vadd.f32 %v1003, %v1019
      %1024 = vset.pattern.permute.xlu0 2
      %1025 = vperm.xlu0 %1024, %v624
      %v1026 = vpop.permute.xlu0 %1025
      %1028 = vset.pattern.permute.xlu0 2
      %1029 = vperm.xlu0 %1028, %v629
      %v1030 = vpop.permute.xlu0 %1029
      %v1032 = vmul.f32 %v1026, %v984
      %v1033 = vmul.f32 %v1030, %v989
      %1036 = vrot.lane.b32.xlu0 %v1032, 112
      %v1037 = vpop.permute.xlu0 %1036
      %1038 = vrot.lane.b32.xlu0 %v1033, 112
      %v1039 = vpop.permute.xlu0 %1038
      %v1042 = vadd.f32 %v1022, %v1037
      %v1043 = vadd.f32 %v1023, %v1039
      %1044 = vset.pattern.permute.xlu0 3
      %1045 = vperm.xlu0 %1044, %v624
      %v1046 = vpop.permute.xlu0 %1045
      %1048 = vset.pattern.permute.xlu0 3
      %1049 = vperm.xlu0 %1048, %v629
      %v1050 = vpop.permute.xlu0 %1049
      %v1052 = vmul.f32 %v1046, %v984
      %v1053 = vmul.f32 %v1050, %v989
      %1056 = vrot.lane.b32.xlu0 %v1052, 104
      %v1057 = vpop.permute.xlu0 %1056
      %1058 = vrot.lane.b32.xlu0 %v1053, 104
      %v1059 = vpop.permute.xlu0 %1058
      %v1062 = vadd.f32 %v1042, %v1057
      %v1063 = vadd.f32 %v1043, %v1059
      %1064 = vset.pattern.permute.xlu0 4
      %1065 = vperm.xlu0 %1064, %v624
      %v1066 = vpop.permute.xlu0 %1065
      %1068 = vset.pattern.permute.xlu0 4
      %1069 = vperm.xlu0 %1068, %v629
      %v1070 = vpop.permute.xlu0 %1069
      %v1072 = vmul.f32 %v1066, %v984
      %v1073 = vmul.f32 %v1070, %v989
      %1076 = vrot.lane.b32.xlu0 %v1072, 96
      %v1077 = vpop.permute.xlu0 %1076
      %1078 = vrot.lane.b32.xlu0 %v1073, 96
      %v1079 = vpop.permute.xlu0 %1078
      %v1082 = vadd.f32 %v1062, %v1077
      %v1083 = vadd.f32 %v1063, %v1079
      %1084 = vset.pattern.permute.xlu0 5
      %1085 = vperm.xlu0 %1084, %v624
      %v1086 = vpop.permute.xlu0 %1085
      %1088 = vset.pattern.permute.xlu0 5
      %1089 = vperm.xlu0 %1088, %v629
      %v1090 = vpop.permute.xlu0 %1089
      %v1092 = vmul.f32 %v1086, %v984
      %v1093 = vmul.f32 %v1090, %v989
      %1096 = vrot.lane.b32.xlu0 %v1092, 88
      %v1097 = vpop.permute.xlu0 %1096
      %1098 = vrot.lane.b32.xlu0 %v1093, 88
      %v1099 = vpop.permute.xlu0 %1098
      %v1102 = vadd.f32 %v1082, %v1097
      %v1103 = vadd.f32 %v1083, %v1099
      %1104 = vset.pattern.permute.xlu0 6
      %1105 = vperm.xlu0 %1104, %v624
      %v1106 = vpop.permute.xlu0 %1105
      %1108 = vset.pattern.permute.xlu0 6
      %1109 = vperm.xlu0 %1108, %v629
      %v1110 = vpop.permute.xlu0 %1109
      %v1112 = vmul.f32 %v1106, %v984
      %v1113 = vmul.f32 %v1110, %v989
      %1116 = vrot.lane.b32.xlu0 %v1112, 80
      %v1117 = vpop.permute.xlu0 %1116
      %1118 = vrot.lane.b32.xlu0 %v1113, 80
      %v1119 = vpop.permute.xlu0 %1118
      %v1122 = vadd.f32 %v1102, %v1117
      %v1123 = vadd.f32 %v1103, %v1119
      %1124 = vset.pattern.permute.xlu0 7
      %1125 = vperm.xlu0 %1124, %v624
      %v1126 = vpop.permute.xlu0 %1125
      %1128 = vset.pattern.permute.xlu0 7
      %1129 = vperm.xlu0 %1128, %v629
      %v1130 = vpop.permute.xlu0 %1129
      %v1132 = vmul.f32 %v1126, %v984
      %v1133 = vmul.f32 %v1130, %v989
      %1136 = vrot.lane.b32.xlu0 %v1132, 72
      %v1137 = vpop.permute.xlu0 %1136
      %1138 = vrot.lane.b32.xlu0 %v1133, 72
      %v1139 = vpop.permute.xlu0 %1138
      %v1142 = vadd.f32 %v1122, %v1137
      %v1143 = vadd.f32 %v1123, %v1139
      %1144 = vst.msk [vmem:[%s509] sm:$0xff] %vm715, %v1142
      %1145 = vst.msk [vmem:[%s509 + $0x8] sm:$0xff] %vm715, %v1143
      %v1146 = vld [vmem:[%s9] sm:$0xf]
      %v1147 = vld [vmem:[%s10] sm:$0x1]
      %v1149 = vlaneseq
      %v1150 = vshrl.u32 %v1149, 7
      %v1151 = vsub.s32 0, %v1150
      %v1152 = vrot.slane %v1147, %v1151
      %v1155 = vsel %vm913, %v1146, 0
      %1157 = vmatprep.subr.mxu0 0.0
      %1158 = vmatpush1.msra.mxu0 %v1155
      %1159 = vmatprep.subr.mxu0 0.0
      %1160 = vmatpush1.msra.mxu0 0.0
      %1161 = vmatprep.subr.mxu0 0.0
      %1162 = vmatpush1.msra.mxu0 0.0
      %1163 = vmatprep.subr.mxu0 0.0
      %1164 = vmatpush1.msra.mxu0 0.0
      %1165 = vmatprep.subr.mxu0 0.0
      %1166 = vmatpush1.msra.mxu0 0.0
      %1167 = vmatprep.subr.mxu0 0.0
      %1168 = vmatpush1.msra.mxu0 0.0
      %1169 = vmatprep.subr.mxu0 0.0
      %1170 = vmatpush1.msra.mxu0 0.0
      %1171 = vmatprep.subr.mxu0 0.0
      %1172 = vmatpush1.msra.mxu0 0.0
      %1173 = vmatprep.subr.mxu0 0.0
      %1174 = vmatpush1.msra.mxu0 0.0
      %1175 = vmatprep.subr.mxu0 0.0
      %1176 = vmatpush1.msra.mxu0 0.0
      %1177 = vmatprep.subr.mxu0 0.0
      %1178 = vmatpush1.msra.mxu0 0.0
      %1179 = vmatprep.subr.mxu0 0.0
      %1180 = vmatpush1.msra.mxu0 0.0
      %1181 = vmatprep.subr.mxu0 0.0
      %1182 = vmatpush1.msra.mxu0 0.0
      %1183 = vmatprep.subr.mxu0 0.0
      %1184 = vmatpush1.msra.mxu0 0.0
      %1185 = vmatprep.subr.mxu0 0.0
      %1186 = vmatpush1.msra.mxu0 0.0
      %1187 = vmatprep.subr.mxu0 0.0
      %1188 = vmatpush1.msra.mxu0 0.0
      %1189 = vmatprep.subr.mxu0 0.0
      %1190 = vmatpush1.msra.mxu0 0.0
      %1191 = vmatprep.subr.mxu0 0.0
      %1192 = vmatpush1.msra.mxu0 0.0
      %1193 = vmatprep.subr.mxu0 0.0
      %1194 = vmatpush1.msra.mxu0 0.0
      %1195 = vmatprep.subr.mxu0 0.0
      %1196 = vmatpush1.msra.mxu0 0.0
      %1197 = vmatprep.subr.mxu0 0.0
      %1198 = vmatpush1.msra.mxu0 0.0
      %1199 = vmatprep.subr.mxu0 0.0
      %1200 = vmatpush1.msra.mxu0 0.0
      %1201 = vmatprep.subr.mxu0 0.0
      %1202 = vmatpush1.msra.mxu0 0.0
      %1203 = vmatprep.subr.mxu0 0.0
      %1204 = vmatpush1.msra.mxu0 0.0
      %1205 = vmatprep.subr.mxu0 0.0
      %1206 = vmatpush1.msra.mxu0 0.0
      %1207 = vmatprep.subr.mxu0 0.0
      %1208 = vmatpush1.msra.mxu0 0.0
      %1209 = vmatprep.subr.mxu0 0.0
      %1210 = vmatpush1.msra.mxu0 0.0
      %1211 = vmatprep.subr.mxu0 0.0
      %1212 = vmatpush1.msra.mxu0 0.0
      %1213 = vmatprep.subr.mxu0 0.0
      %1214 = vmatpush1.msra.mxu0 0.0
      %1215 = vmatprep.subr.mxu0 0.0
      %1216 = vmatpush1.msra.mxu0 0.0
      %1217 = vmatprep.subr.mxu0 0.0
      %1218 = vmatpush1.msra.mxu0 0.0
      %1219 = vmatprep.subr.mxu0 0.0
      %1220 = vmatpush1.msra.mxu0 0.0
      %1221 = vmatprep.mubr.f32.mxu0 0.0
      %1222 = vmatmul.mubr.f32.gmra.mrb[0].mxu0 %v908
      %v1223 = vpop.f32.mrb[0].mxu0
      %v1224 = vadd.f32 %v1152, %v1223
      %v1225 = vpop.f32.mrb[0].mxu0
      %1226 = vmatprep.mubr.f32.mxu0 0.0
      %1227 = vmatmul.mubr.f32.gmra.mrb[0].mxu0 %v911
      %v1228 = vpop.f32.mrb[0].mxu0
      %v1229 = vadd.f32 %v1152, %v1228
      %v1230 = vpop.f32.mrb[0].mxu0
      %1231 = vdwg.mxu0
      %v1232 = vmul.f32 %v994, %v1224
      %v1233 = vmul.f32 %v998, %v1229
      %v1234 = vadd.f32 %v1232, 0.0
      %v1235 = vadd.f32 %v1233, 0.0
      %v1236 = vmul.f32 %v1006, %v1224
      %v1237 = vmul.f32 %v1010, %v1229
      %1240 = vrot.lane.b32.xlu0 %v1236, 120
      %v1241 = vpop.permute.xlu0 %1240
      %1242 = vrot.lane.b32.xlu0 %v1237, 120
      %v1243 = vpop.permute.xlu0 %1242
      %v1246 = vadd.f32 %v1234, %v1241
      %v1247 = vadd.f32 %v1235, %v1243
      %v1248 = vmul.f32 %v1026, %v1224
      %v1249 = vmul.f32 %v1030, %v1229
      %1252 = vrot.lane.b32.xlu0 %v1248, 112
      %v1253 = vpop.permute.xlu0 %1252
      %1254 = vrot.lane.b32.xlu0 %v1249, 112
      %v1255 = vpop.permute.xlu0 %1254
      %v1258 = vadd.f32 %v1246, %v1253
      %v1259 = vadd.f32 %v1247, %v1255
      %v1260 = vmul.f32 %v1046, %v1224
      %v1261 = vmul.f32 %v1050, %v1229
      %1264 = vrot.lane.b32.xlu0 %v1260, 104
      %v1265 = vpop.permute.xlu0 %1264
      %1266 = vrot.lane.b32.xlu0 %v1261, 104
      %v1267 = vpop.permute.xlu0 %1266
      %v1270 = vadd.f32 %v1258, %v1265
      %v1271 = vadd.f32 %v1259, %v1267
      %v1272 = vmul.f32 %v1066, %v1224
      %v1273 = vmul.f32 %v1070, %v1229
      %1276 = vrot.lane.b32.xlu0 %v1272, 96
      %v1277 = vpop.permute.xlu0 %1276
      %1278 = vrot.lane.b32.xlu0 %v1273, 96
      %v1279 = vpop.permute.xlu0 %1278
      %v1282 = vadd.f32 %v1270, %v1277
      %v1283 = vadd.f32 %v1271, %v1279
      %v1284 = vmul.f32 %v1086, %v1224
      %v1285 = vmul.f32 %v1090, %v1229
      %1288 = vrot.lane.b32.xlu0 %v1284, 88
      %v1289 = vpop.permute.xlu0 %1288
      %1290 = vrot.lane.b32.xlu0 %v1285, 88
      %v1291 = vpop.permute.xlu0 %1290
      %v1294 = vadd.f32 %v1282, %v1289
      %v1295 = vadd.f32 %v1283, %v1291
      %v1296 = vmul.f32 %v1106, %v1224
      %v1297 = vmul.f32 %v1110, %v1229
      %1300 = vrot.lane.b32.xlu0 %v1296, 80
      %v1301 = vpop.permute.xlu0 %1300
      %1302 = vrot.lane.b32.xlu0 %v1297, 80
      %v1303 = vpop.permute.xlu0 %1302
      %v1306 = vadd.f32 %v1294, %v1301
      %v1307 = vadd.f32 %v1295, %v1303
      %v1308 = vmul.f32 %v1126, %v1224
      %v1309 = vmul.f32 %v1130, %v1229
      %1312 = vrot.lane.b32.xlu0 %v1308, 72
      %v1313 = vpop.permute.xlu0 %1312
      %1314 = vrot.lane.b32.xlu0 %v1309, 72
      %v1315 = vpop.permute.xlu0 %1314
      %v1318 = vadd.f32 %v1306, %v1313
      %v1319 = vadd.f32 %v1307, %v1315
      %1320 = vst.msk [vmem:[%s515] sm:$0xff] %vm715, %v1318
      %1321 = vst.msk [vmem:[%s515 + $0x8] sm:$0xff] %vm715, %v1319
      %s1322 = smul.u32 2, %s27
      %p1323 = scmp.lt.s32.totalorder %s1322, 5
      %s1324 = scalar_select %p1323, %s1322, 5
      %s1325 = smul.addr %s1324, 8
      %s1326 = scalar_lea.vmem %s11, %s1325
      %s1327 = smul.u32 2, %s27
      %p1328 = scmp.lt.s32.totalorder %s1327, 5
      %s1329 = scalar_select %p1328, %s1327, 5
      %s1330 = smul.addr %s1329, 8
      %s1331 = scalar_lea.vmem %s12, %s1330
      %s1332 = smul.u32 2, %s27
      %p1333 = scmp.lt.s32.totalorder %s1332, 5
      %s1334 = scalar_select %p1333, %s1332, 5
      %s1335 = smul.addr %s1334, 8
      %s1336 = scalar_lea.vmem %s13, %s1335
      // Predicated region
      $region65: #{tpu_custom_call.1} parent=63 // pred_check
        %p1337 = pneg %p291
      $region66: #{tpu_custom_call.1} parent=63 // pred_check_branch
        %1339 = sbr.rel (%p1337) target = $region68
      $region67: #{tpu_custom_call.1} parent=63 // pred_region
        %s1340 = smul.u32 2, %s27
      $region68: #{tpu_custom_call.1} parent=63 // pred_fallthru
        _
      // Predicated region
      $region69: #{tpu_custom_call.1} parent=63 // pred_check
        %p1341 = pneg %p317
      $region70: #{tpu_custom_call.1} parent=63 // pred_check_branch
        %1343 = sbr.rel (%p1341) target = $region72
      $region71: #{tpu_custom_call.1} parent=63 // pred_region
        %s1344 = smul.u32 2, %s27
      $region72: #{tpu_custom_call.1} parent=63 // pred_fallthru
        _
      // Predicated region
      $region73: #{tpu_custom_call.1} parent=63 // pred_check
        %p1345 = pneg %p343
      $region74: #{tpu_custom_call.1} parent=63 // pred_check_branch
        %1347 = sbr.rel (%p1345) target = $region76
      $region75: #{tpu_custom_call.1} parent=63 // pred_region
        %s1348 = smul.u32 2, %s27
      $region76: #{tpu_custom_call.1} parent=63 // pred_fallthru
        _
    $region64: #{tpu_custom_call.1} parent=5 // pred_fallthru
      _
    %p1349 = scmp.le.s32.totalorder 2, %s22
    // Predicated region
    $region77: #{tpu_custom_call.1} parent=5 // pred_check
      %p1350 = pneg %p1349
    $region78: #{tpu_custom_call.1} parent=5 // pred_check_branch
      %1352 = sbr.rel (%p1350) target = $region80
    $region79: #{tpu_custom_call.1} parent=5 // pred_region
      %s1353 = ssub.s32 %s22, 2
      // Predicated region
      $region81: #{tpu_custom_call.1} parent=79 // pred_check
        %p1354 = pneg %p297
      $region82: #{tpu_custom_call.1} parent=79 // pred_check_branch
        %1356 = sbr.rel (%p1354) target = $region84
      $region83: #{tpu_custom_call.1} parent=79 // pred_region
        %s1357 = smul.u32 2, %s28
        %p1358 = scmp.lt.s32.totalorder %s1357, 5
        %s1359 = scalar_select %p1358, %s1357, 5
        %s1360 = smul.addr %s1359, 8
        %s1361 = scalar_lea.vmem %s11, %s1360
      $region84: #{tpu_custom_call.1} parent=79 // pred_fallthru
        _
      // Predicated region
      $region85: #{tpu_custom_call.1} parent=79 // pred_check
        %p1362 = pneg %p323
      $region86: #{tpu_custom_call.1} parent=79 // pred_check_branch
        %1364 = sbr.rel (%p1362) target = $region88
      $region87: #{tpu_custom_call.1} parent=79 // pred_region
        %s1365 = smul.u32 2, %s28
        %p1366 = scmp.lt.s32.totalorder %s1365, 5
        %s1367 = scalar_select %p1366, %s1365, 5
        %s1368 = smul.addr %s1367, 8
        %s1369 = scalar_lea.vmem %s12, %s1368
      $region88: #{tpu_custom_call.1} parent=79 // pred_fallthru
        _
      // Predicated region
      $region89: #{tpu_custom_call.1} parent=79 // pred_check
        %p1370 = pneg %p349
      $region90: #{tpu_custom_call.1} parent=79 // pred_check_branch
        %1372 = sbr.rel (%p1370) target = $region92
      $region91: #{tpu_custom_call.1} parent=79 // pred_region
        %s1373 = smul.u32 2, %s28
        %p1374 = scmp.lt.s32.totalorder %s1373, 5
        %s1375 = scalar_select %p1374, %s1373, 5
        %s1376 = smul.addr %s1375, 8
        %s1377 = scalar_lea.vmem %s13, %s1376
      $region92: #{tpu_custom_call.1} parent=79 // pred_fallthru
        _
    $region80: #{tpu_custom_call.1} parent=5 // pred_fallthru
      _
  $region6: #{tpu_custom_call.1} parent=0 // loop_footer
    %s26 = sadd.s32 1, %s22
  $region7: #{tpu_custom_call.1} parent=0 // loop_footer_branch
    %21 = sbr.rel target = $region3
  $region8: #{tpu_custom_call.1} parent=0 // loop_exit
    _

</llo_original>
